<compile_context>
chip_gen: v7x
topology: tpu7x:2x2x1
jax: 0.10.0
libtpu: 0.0.40
codegen_flags: <defaults>
</compile_context>

<pallas_src>
import math
import numpy as np

import jax
import jax.numpy as jnp
from jax import lax
from jax.experimental import pallas as pl
from jax.experimental.pallas import tpu as pltpu

C_MID = 64       # conv1 output channels (fixed by the module)
GUARD = 128      # lane guard prefix so all tap offsets stay non-negative


def _conv_relu_conv_kernel(x_ref, w1_ref, b1_ref, w2f_ref, b2_ref, cmask_ref,
                           o_ref, xpad_ref, p1_ref, mid_ref):
    # x_ref    : (1, Cin, H, W)  f32   full NCHW image of one batch element
    # w1_ref   : (64, 9*Cin_p)   f32   conv1 im2col weights (Cin zero-padded to 8)
    # b1_ref   : (64, 1)         f32
    # w2f_ref  : (3, 3*Cout, 64) bf16  conv2 weights, dy-major / (dx,co) rows
    # b2_ref   : (Cout, 1)       f32
    # cmask_ref: (1, M1)         f32   static lane mask of the widened layout
    # o_ref    : (1, Cout, S*W)  f32   lane-dense NCHW-flat output strip
    # xpad_ref : (Cin_p, Lx)     f32   flat zero-haloed input (row stride W+2)
    # p1_ref   : (9*Cin_p, M1)   f32   conv1 im2col patches
    # mid_ref  : (64, Lm)        bf16  flat zero-haloed post-ReLU intermediate
    Cin = x_ref.shape[1]
    H, W = x_ref.shape[2], x_ref.shape[3]
    Cout = o_ref.shape[1]
    S = o_ref.shape[2] // W
    Wp = W + 2
    M1 = (S + 2) * Wp          # conv1 positions (S output rows + 1 halo row each side)
    M2 = S * Wp                # conv2 positions (widened by 2 junk lanes per row)
    Cin_p = xpad_ref.shape[0]
    Cm = mid_ref.shape[0]
    Lx = xpad_ref.shape[1]
    Lm = mid_ref.shape[1]
    G = GUARD

    s_id = pl.program_id(1)
    r0 = s_id * S              # first output row of this strip

    # ---- zero-haloed conv1 input, flat widened layout (logical idx = row*Wp+col) ---
    xpad_ref[...] = jnp.zeros((Cin_p, Lx), jnp.float32)
    for k in range(S + 4):                       # input rows r0-2 .. r0+S+1
        row = r0 - 2 + k
        ok = jnp.logical_and(row >= 0, row < H).astype(jnp.float32)
        row_c = jnp.clip(row, 0, H - 1)
        v = x_ref[0, :, pl.ds(row_c, 1), :]      # (Cin, 1, W)
        v = v[:, 0, :] * ok                      # (Cin, W); zero if out of image
        a = G + k * Wp + 1
        xpad_ref[0:Cin, a:a + W] = v

    # ---- conv1 im2col: 9 contiguous-offset slices, sublane-aligned dense stores ---
    for t in range(9):
        dy, dx = divmod(t, 3)
        a = (G - 1) + dy * Wp + dx
        p1_ref[t * Cin_p:(t + 1) * Cin_p, :] = xpad_ref[:, a:a + M1]

    # ---- conv1 + bias + ReLU: one MXU matmul with folded K (f32 path, tiny) ---
    h = jnp.dot(w1_ref[...], p1_ref[...], preferred_element_type=jnp.float32)
    h = jnp.maximum(h + b1_ref[...], 0.0)        # (64, M1)

    # ---- mask widened-junk lanes / out-of-image rows -> exact zero-padded
    #      intermediate, stored once as bf16 at a 128-aligned offset (dense vst) ---
    m_i = lax.broadcasted_iota(jnp.int32, (1, M1), 1)
    lo = (1 - r0) * Wp
    hi = (H + 1 - r0) * Wp
    row_ok = jnp.logical_and(m_i >= lo, m_i < hi)
    hm = jnp.where(row_ok, h, 0.0) * cmask_ref[...]
    mid_ref[:, 0:G] = jnp.zeros((Cm, G), jnp.bfloat16)
    mid_ref[:, G + M1:Lm] = jnp.zeros((Cm, Lm - G - M1), jnp.bfloat16)
    mid_ref[:, G:G + M1] = hm.astype(jnp.bfloat16)

    # ---- conv2: dy folded into the LHS (3 bf16 matmuls); dx applied as lane
    #      shifts on the tiny (Cout, M2) results -> intermediate read only 3x ---
    acc = jnp.zeros((Cout, M2), jnp.float32) + b2_ref[...]
    for dy in range(3):
        a = (G - 1) + dy * Wp
        r = lax.dot_general(w2f_ref[dy], mid_ref[:, a:a + M2 + 2],
                            (((1,), (0,)), ((), ())),
                            preferred_element_type=jnp.float32)   # (3*Cout, M2+2)
        for dx in range(3):
            acc = acc + r[dx * Cout:(dx + 1) * Cout, dx:dx + M2]

    # ---- compact the widened rows into the lane-dense (Cout, S*W) output block ---
    for i in range(S):
        o_ref[0, :, i * W:(i + 1) * W] = acc[:, i * Wp + 1:i * Wp + 1 + W]


def _choose_strip(H, W):
    """Strip height: divides H, strip*W % 128 == 0, bounded widened lane count."""
    g = 128 // math.gcd(W, 128)                    # strip must be a multiple of g
    cap = max(g, ((16384 // (W + 2)) // g) * g)    # keep (S+2)*(W+2) lanes modest
    hi = min(H // 2, cap)                          # prefer >= 2 strips (megacore)
    for s in range(hi, 0, -1):
        if H % s == 0 and s % g == 0:
            return s
    # TODO(synk): masked ragged last strip; for now fall back to a single strip.
    return H


def advanced_video_model(x_nchw, w1, b1, w2, b2):
    """Forward pass of AdvancedVideoModel.

    Args:
      x_nchw: (N, Cin, H, W) float32 (PyTorch NCHW layout, consumed directly).
      w1: (64, Cin, 3, 3), b1: (64,)      -- conv1 params (PyTorch OIHW).
      w2: (Cout, 64, 3, 3), b2: (Cout,)   -- conv2 params (PyTorch OIHW).
    Returns:
      (N, Cout, H, W) float32.
    """
    N, Cin, H, W = x_nchw.shape
    Cout = w2.shape[0]
    S = _choose_strip(H, W)
    num_strips = H // S
    Wp = W + 2
    M1 = (S + 2) * Wp
    Cin_p = ((Cin + 7) // 8) * 8
    Lx = GUARD + (S + 4) * Wp + 8
    Lm = GUARD + M1 + 8

    # Weights -> im2col / dy-folded layouts (one-time, tiny).
    w1m = jnp.transpose(w1, (0, 2, 3, 1))                       # (64, 3, 3, Cin)
    w1m = jnp.pad(w1m, ((0, 0), (0, 0), (0, 0), (0, Cin_p - Cin)))
    w1m = w1m.reshape(C_MID, 9 * Cin_p)                         # cols: (dy*3+dx)*Cin_p + ci
    b1m = b1.reshape(C_MID, 1)
    w2f = jnp.transpose(w2, (2, 3, 0, 1)).reshape(3, 3 * Cout, C_MID)  # [dy, dx*Cout+co, c]
    w2f = w2f.astype(jnp.bfloat16)
    b2m = b2.reshape(Cout, 1)

    # Static lane mask of the widened (row stride = W+2) layout: 0 on junk lanes.
    cols = np.arange(M1) % Wp
    cmask = jnp.asarray(((cols >= 1) & (cols <= W)).astype(np.float32)[None, :])

    # VMEM budget: double-buffered I/O blocks + single-buffered scratch + margin.
    blk = 2 * (Cin * H * W * 4 + Cout * S * W * 4 + w1m.size * 4 + C_MID * 4 +
               w2f.size * 2 + Cout * 4 + M1 * 4)
    scratch = Cin_p * Lx * 4 + 9 * Cin_p * M1 * 4 + C_MID * Lm * 2
    vmem_limit = int(min(64 * 2**20, max(32 * 2**20, 2 * (blk + scratch) + (8 << 20))))

    out_flat = pl.pallas_call(
        _conv_relu_conv_kernel,
        out_shape=jax.ShapeDtypeStruct((N, Cout, H * W), jnp.float32),
        grid_spec=pltpu.PrefetchScalarGridSpec(
            num_scalar_prefetch=0,
            grid=(N, num_strips),
            in_specs=[
                pl.BlockSpec((1, Cin, H, W), lambda n, s: (n, 0, 0, 0)),
                pl.BlockSpec((C_MID, 9 * Cin_p), lambda n, s: (0, 0)),
                pl.BlockSpec((C_MID, 1), lambda n, s: (0, 0)),
                pl.BlockSpec((3, 3 * Cout, C_MID), lambda n, s: (0, 0, 0)),
                pl.BlockSpec((Cout, 1), lambda n, s: (0, 0)),
                pl.BlockSpec((1, M1), lambda n, s: (0, 0)),
            ],
            out_specs=pl.BlockSpec((1, Cout, S * W), lambda n, s: (n, 0, s)),
            scratch_shapes=[
                pltpu.VMEM((Cin_p, Lx), jnp.float32),        # flat padded input
                pltpu.VMEM((9 * Cin_p, M1), jnp.float32),    # conv1 im2col patches
                pltpu.VMEM((C_MID, Lm), jnp.bfloat16),       # flat padded intermediate
            ],
        ),
        compiler_params=pltpu.CompilerParams(
            dimension_semantics=("parallel", "parallel"),
            vmem_limit_bytes=vmem_limit),
    )(x_nchw, w1m, b1m, w2f, b2m, cmask)

    # NCHW-flat -> NCHW is a pure metadata reshape (no transpose, no HBM pass).
    return out_flat.reshape(N, Cout, H, W)


def _reference(x_nchw, w1, b1, w2, b2):
    """Pure-JAX f32 reference (lax.conv) mirroring the PyTorch forward."""
    dn = ("NCHW", "OIHW", "NCHW")
    h = lax.conv_general_dilated(x_nchw, w1, (1, 1), ((1, 1), (1, 1)),
                                 dimension_numbers=dn)
    h = jnp.maximum(h + b1.reshape(1, -1, 1, 1), 0.0)
    o = lax.conv_general_dilated(h, w2, (1, 1), ((1, 1), (1, 1)),
                                 dimension_numbers=dn)
    return o + b2.reshape(1, -1, 1, 1)


if __name__ == "__main__":
    # Module defaults: n_frames_input=5 -> conv1 in_channels = 5.
    N, Cin, H, W = 2, 5, 16, 16
    Cout = 2

    key = jax.random.PRNGKey(0)
    kx, kw1, kb1, kw2, kb2 = jax.random.split(key, 5)

    x = jax.random.normal(kx, (N, Cin, H, W), dtype=jnp.float32)
    w1 = 0.1 * jax.random.normal(kw1, (C_MID, Cin, 3, 3), dtype=jnp.float32)
    b1 = 0.1 * jax.random.normal(kb1, (C_MID,), dtype=jnp.float32)
    w2 = 0.1 * jax.random.normal(kw2, (Cout, C_MID, 3, 3), dtype=jnp.float32)
    b2 = 0.1 * jax.random.normal(kb2, (Cout,), dtype=jnp.float32)

    out = jax.block_until_ready(advanced_video_model(x, w1, b1, w2, b2))
    ref = jax.block_until_ready(_reference(x, w1, b1, w2, b2))

    assert out.shape == (N, Cout, H, W), out.shape
    # conv2 runs with bf16 operands (f32 accumulation) -> bf16-appropriate tolerance.
    max_err = float(jnp.max(jnp.abs(out - ref)))
    assert max_err < 3e-2, max_err

    print("KERNEL_OK")
</pallas_src>

<mosaic_0001>
module attributes {stable_mosaic.version = 11 : i64} {
  func.func @_conv_relu_conv_kernel(%arg0: i32, %arg1: i32, %arg2: memref<1x5x16x16xf32, #tpu.memory_space<vmem>>, %arg3: memref<64x72xf32, #tpu.memory_space<vmem>>, %arg4: memref<64x1xf32, #tpu.memory_space<vmem>>, %arg5: memref<3x6x64xbf16, #tpu.memory_space<vmem>>, %arg6: memref<2x1xf32, #tpu.memory_space<vmem>>, %arg7: memref<1x180xf32, #tpu.memory_space<vmem>>, %arg8: memref<1x2x128xf32, #tpu.memory_space<vmem>>, %arg9: memref<8x352xf32, #tpu.memory_space<vmem>>, %arg10: memref<72x180xf32, #tpu.memory_space<vmem>>, %arg11: memref<64x316xbf16, #tpu.memory_space<vmem>>) attributes {dimension_semantics = [#tpu.dimension_semantics<parallel>, #tpu.dimension_semantics<parallel>], iteration_bounds = array<i64: 2, 2>, scalar_prefetch = 0 : i64, scratch_operands = 3 : i64, tpu.core_type = #tpu.core_type<tc>, window_params = [{transform_indices = @transform_0, window_bounds = array<i64: 1, 5, 16, 16>}, {pipeline_mode = #tpu.pipeline_mode<synchronous>, transform_indices = @transform_1, window_bounds = array<i64: 64, 72>}, {pipeline_mode = #tpu.pipeline_mode<synchronous>, transform_indices = @transform_2, window_bounds = array<i64: 64, 1>}, {pipeline_mode = #tpu.pipeline_mode<synchronous>, transform_indices = @transform_3, window_bounds = array<i64: 3, 6, 64>}, {pipeline_mode = #tpu.pipeline_mode<synchronous>, transform_indices = @transform_4, window_bounds = array<i64: 2, 1>}, {pipeline_mode = #tpu.pipeline_mode<synchronous>, transform_indices = @transform_5, window_bounds = array<i64: 1, 180>}, {transform_indices = @transform_6, window_bounds = array<i64: 1, 2, 128>}]} {
    %c8_i32 = arith.constant 8 : i32
    %0 = arith.muli %arg1, %c8_i32 : i32
    %cst = arith.constant 0.000000e+00 : f32
    %1 = vector.broadcast %cst : f32 to vector<8x352xf32>
    %c0 = arith.constant 0 : index
    %c0_0 = arith.constant 0 : index
    %2 = vector.load %arg9[%c0, %c0_0] : memref<8x352xf32, #tpu.memory_space<vmem>>, vector<8x352xf32>
    tpu.vector_store %arg9[%c0, %c0_0], %1 {strides = array<i32>} : memref<8x352xf32, #tpu.memory_space<vmem>>, vector<8x352xf32>,
    %c2_i32 = arith.constant 2 : i32
    %3 = arith.subi %0, %c2_i32 : i32
    %c0_i32 = arith.constant 0 : i32
    %4 = arith.addi %3, %c0_i32 : i32
    %c0_i32_1 = arith.constant 0 : i32
    %5 = arith.cmpi sge, %4, %c0_i32_1 : i32
    %c16_i32 = arith.constant 16 : i32
    %6 = arith.cmpi slt, %4, %c16_i32 : i32
    %7 = arith.andi %5, %6 : i1
    %8 = arith.extui %7 : i1 to i32
    %9 = arith.sitofp %8 : i32 to f32
    %c0_i32_2 = arith.constant 0 : i32
    %c15_i32 = arith.constant 15 : i32
    %10 = arith.maxsi %c0_i32_2, %4 : i32
    %11 = arith.minsi %c15_i32, %10 : i32
    %c0_3 = arith.constant 0 : index
    %c0_4 = arith.constant 0 : index
    %12 = arith.index_cast %11 : i32 to index
    %c0_5 = arith.constant 0 : index
    %13 = vector.load %arg2[%c0_3, %c0_4, %12, %c0_5] : memref<1x5x16x16xf32, #tpu.memory_space<vmem>>, vector<1x5x1x16xf32>
    %14 = vector.shape_cast %13 : vector<1x5x1x16xf32> to vector<5x1x16xf32>
    %15 = vector.shape_cast %14 : vector<5x1x16xf32> to vector<5x16xf32>
    %16 = vector.broadcast %9 : f32 to vector<5x16xf32>
    %17 = arith.mulf %15, %16 : vector<5x16xf32>
    %c0_6 = arith.constant 0 : index
    %c129 = arith.constant 129 : index
    %18 = vector.load %arg9[%c0_6, %c129] : memref<8x352xf32, #tpu.memory_space<vmem>>, vector<5x16xf32>
    tpu.vector_store %arg9[%c0_6, %c129], %17 {strides = array<i32>} : memref<8x352xf32, #tpu.memory_space<vmem>>, vector<5x16xf32>,
    %c2_i32_7 = arith.constant 2 : i32
    %19 = arith.subi %0, %c2_i32_7 : i32
    %c1_i32 = arith.constant 1 : i32
    %20 = arith.addi %19, %c1_i32 : i32
    %c0_i32_8 = arith.constant 0 : i32
    %21 = arith.cmpi sge, %20, %c0_i32_8 : i32
    %c16_i32_9 = arith.constant 16 : i32
    %22 = arith.cmpi slt, %20, %c16_i32_9 : i32
    %23 = arith.andi %21, %22 : i1
    %24 = arith.extui %23 : i1 to i32
    %25 = arith.sitofp %24 : i32 to f32
    %c0_i32_10 = arith.constant 0 : i32
    %c15_i32_11 = arith.constant 15 : i32
    %26 = arith.maxsi %c0_i32_10, %20 : i32
    %27 = arith.minsi %c15_i32_11, %26 : i32
    %c0_12 = arith.constant 0 : index
    %c0_13 = arith.constant 0 : index
    %28 = arith.index_cast %27 : i32 to index
    %c0_14 = arith.constant 0 : index
    %29 = vector.load %arg2[%c0_12, %c0_13, %28, %c0_14] : memref<1x5x16x16xf32, #tpu.memory_space<vmem>>, vector<1x5x1x16xf32>
    %30 = vector.shape_cast %29 : vector<1x5x1x16xf32> to vector<5x1x16xf32>
    %31 = vector.shape_cast %30 : vector<5x1x16xf32> to vector<5x16xf32>
    %32 = vector.broadcast %25 : f32 to vector<5x16xf32>
    %33 = arith.mulf %31, %32 : vector<5x16xf32>
    %c0_15 = arith.constant 0 : index
    %c147 = arith.constant 147 : index
    %34 = vector.load %arg9[%c0_15, %c147] : memref<8x352xf32, #tpu.memory_space<vmem>>, vector<5x16xf32>
    tpu.vector_store %arg9[%c0_15, %c147], %33 {strides = array<i32>} : memref<8x352xf32, #tpu.memory_space<vmem>>, vector<5x16xf32>,
    %c2_i32_16 = arith.constant 2 : i32
    %35 = arith.subi %0, %c2_i32_16 : i32
    %c2_i32_17 = arith.constant 2 : i32
    %36 = arith.addi %35, %c2_i32_17 : i32
    %c0_i32_18 = arith.constant 0 : i32
    %37 = arith.cmpi sge, %36, %c0_i32_18 : i32
    %c16_i32_19 = arith.constant 16 : i32
    %38 = arith.cmpi slt, %36, %c16_i32_19 : i32
    %39 = arith.andi %37, %38 : i1
    %40 = arith.extui %39 : i1 to i32
    %41 = arith.sitofp %40 : i32 to f32
    %c0_i32_20 = arith.constant 0 : i32
    %c15_i32_21 = arith.constant 15 : i32
    %42 = arith.maxsi %c0_i32_20, %36 : i32
    %43 = arith.minsi %c15_i32_21, %42 : i32
    %c0_22 = arith.constant 0 : index
    %c0_23 = arith.constant 0 : index
    %44 = arith.index_cast %43 : i32 to index
    %c0_24 = arith.constant 0 : index
    %45 = vector.load %arg2[%c0_22, %c0_23, %44, %c0_24] : memref<1x5x16x16xf32, #tpu.memory_space<vmem>>, vector<1x5x1x16xf32>
    %46 = vector.shape_cast %45 : vector<1x5x1x16xf32> to vector<5x1x16xf32>
    %47 = vector.shape_cast %46 : vector<5x1x16xf32> to vector<5x16xf32>
    %48 = vector.broadcast %41 : f32 to vector<5x16xf32>
    %49 = arith.mulf %47, %48 : vector<5x16xf32>
    %c0_25 = arith.constant 0 : index
    %c165 = arith.constant 165 : index
    %50 = vector.load %arg9[%c0_25, %c165] : memref<8x352xf32, #tpu.memory_space<vmem>>, vector<5x16xf32>
    tpu.vector_store %arg9[%c0_25, %c165], %49 {strides = array<i32>} : memref<8x352xf32, #tpu.memory_space<vmem>>, vector<5x16xf32>,
    %c2_i32_26 = arith.constant 2 : i32
    %51 = arith.subi %0, %c2_i32_26 : i32
    %c3_i32 = arith.constant 3 : i32
    %52 = arith.addi %51, %c3_i32 : i32
    %c0_i32_27 = arith.constant 0 : i32
    %53 = arith.cmpi sge, %52, %c0_i32_27 : i32
    %c16_i32_28 = arith.constant 16 : i32
    %54 = arith.cmpi slt, %52, %c16_i32_28 : i32
    %55 = arith.andi %53, %54 : i1
    %56 = arith.extui %55 : i1 to i32
    %57 = arith.sitofp %56 : i32 to f32
    %c0_i32_29 = arith.constant 0 : i32
    %c15_i32_30 = arith.constant 15 : i32
    %58 = arith.maxsi %c0_i32_29, %52 : i32
    %59 = arith.minsi %c15_i32_30, %58 : i32
    %c0_31 = arith.constant 0 : index
    %c0_32 = arith.constant 0 : index
    %60 = arith.index_cast %59 : i32 to index
    %c0_33 = arith.constant 0 : index
    %61 = vector.load %arg2[%c0_31, %c0_32, %60, %c0_33] : memref<1x5x16x16xf32, #tpu.memory_space<vmem>>, vector<1x5x1x16xf32>
    %62 = vector.shape_cast %61 : vector<1x5x1x16xf32> to vector<5x1x16xf32>
    %63 = vector.shape_cast %62 : vector<5x1x16xf32> to vector<5x16xf32>
    %64 = vector.broadcast %57 : f32 to vector<5x16xf32>
    %65 = arith.mulf %63, %64 : vector<5x16xf32>
    %c0_34 = arith.constant 0 : index
    %c183 = arith.constant 183 : index
    %66 = vector.load %arg9[%c0_34, %c183] : memref<8x352xf32, #tpu.memory_space<vmem>>, vector<5x16xf32>
    tpu.vector_store %arg9[%c0_34, %c183], %65 {strides = array<i32>} : memref<8x352xf32, #tpu.memory_space<vmem>>, vector<5x16xf32>,
    %c2_i32_35 = arith.constant 2 : i32
    %67 = arith.subi %0, %c2_i32_35 : i32
    %c4_i32 = arith.constant 4 : i32
    %68 = arith.addi %67, %c4_i32 : i32
    %c0_i32_36 = arith.constant 0 : i32
    %69 = arith.cmpi sge, %68, %c0_i32_36 : i32
    %c16_i32_37 = arith.constant 16 : i32
    %70 = arith.cmpi slt, %68, %c16_i32_37 : i32
    %71 = arith.andi %69, %70 : i1
    %72 = arith.extui %71 : i1 to i32
    %73 = arith.sitofp %72 : i32 to f32
    %c0_i32_38 = arith.constant 0 : i32
    %c15_i32_39 = arith.constant 15 : i32
    %74 = arith.maxsi %c0_i32_38, %68 : i32
    %75 = arith.minsi %c15_i32_39, %74 : i32
    %c0_40 = arith.constant 0 : index
    %c0_41 = arith.constant 0 : index
    %76 = arith.index_cast %75 : i32 to index
    %c0_42 = arith.constant 0 : index
    %77 = vector.load %arg2[%c0_40, %c0_41, %76, %c0_42] : memref<1x5x16x16xf32, #tpu.memory_space<vmem>>, vector<1x5x1x16xf32>
    %78 = vector.shape_cast %77 : vector<1x5x1x16xf32> to vector<5x1x16xf32>
    %79 = vector.shape_cast %78 : vector<5x1x16xf32> to vector<5x16xf32>
    %80 = vector.broadcast %73 : f32 to vector<5x16xf32>
    %81 = arith.mulf %79, %80 : vector<5x16xf32>
    %c0_43 = arith.constant 0 : index
    %c201 = arith.constant 201 : index
    %82 = vector.load %arg9[%c0_43, %c201] : memref<8x352xf32, #tpu.memory_space<vmem>>, vector<5x16xf32>
    tpu.vector_store %arg9[%c0_43, %c201], %81 {strides = array<i32>} : memref<8x352xf32, #tpu.memory_space<vmem>>, vector<5x16xf32>,
    %c2_i32_44 = arith.constant 2 : i32
    %83 = arith.subi %0, %c2_i32_44 : i32
    %c5_i32 = arith.constant 5 : i32
    %84 = arith.addi %83, %c5_i32 : i32
    %c0_i32_45 = arith.constant 0 : i32
    %85 = arith.cmpi sge, %84, %c0_i32_45 : i32
    %c16_i32_46 = arith.constant 16 : i32
    %86 = arith.cmpi slt, %84, %c16_i32_46 : i32
    %87 = arith.andi %85, %86 : i1
    %88 = arith.extui %87 : i1 to i32
    %89 = arith.sitofp %88 : i32 to f32
    %c0_i32_47 = arith.constant 0 : i32
    %c15_i32_48 = arith.constant 15 : i32
    %90 = arith.maxsi %c0_i32_47, %84 : i32
    %91 = arith.minsi %c15_i32_48, %90 : i32
    %c0_49 = arith.constant 0 : index
    %c0_50 = arith.constant 0 : index
    %92 = arith.index_cast %91 : i32 to index
    %c0_51 = arith.constant 0 : index
    %93 = vector.load %arg2[%c0_49, %c0_50, %92, %c0_51] : memref<1x5x16x16xf32, #tpu.memory_space<vmem>>, vector<1x5x1x16xf32>
    %94 = vector.shape_cast %93 : vector<1x5x1x16xf32> to vector<5x1x16xf32>
    %95 = vector.shape_cast %94 : vector<5x1x16xf32> to vector<5x16xf32>
    %96 = vector.broadcast %89 : f32 to vector<5x16xf32>
    %97 = arith.mulf %95, %96 : vector<5x16xf32>
    %c0_52 = arith.constant 0 : index
    %c219 = arith.constant 219 : index
    %98 = vector.load %arg9[%c0_52, %c219] : memref<8x352xf32, #tpu.memory_space<vmem>>, vector<5x16xf32>
    tpu.vector_store %arg9[%c0_52, %c219], %97 {strides = array<i32>} : memref<8x352xf32, #tpu.memory_space<vmem>>, vector<5x16xf32>,
    %c2_i32_53 = arith.constant 2 : i32
    %99 = arith.subi %0, %c2_i32_53 : i32
    %c6_i32 = arith.constant 6 : i32
    %100 = arith.addi %99, %c6_i32 : i32
    %c0_i32_54 = arith.constant 0 : i32
    %101 = arith.cmpi sge, %100, %c0_i32_54 : i32
    %c16_i32_55 = arith.constant 16 : i32
    %102 = arith.cmpi slt, %100, %c16_i32_55 : i32
    %103 = arith.andi %101, %102 : i1
    %104 = arith.extui %103 : i1 to i32
    %105 = arith.sitofp %104 : i32 to f32
    %c0_i32_56 = arith.constant 0 : i32
    %c15_i32_57 = arith.constant 15 : i32
    %106 = arith.maxsi %c0_i32_56, %100 : i32
    %107 = arith.minsi %c15_i32_57, %106 : i32
    %c0_58 = arith.constant 0 : index
    %c0_59 = arith.constant 0 : index
    %108 = arith.index_cast %107 : i32 to index
    %c0_60 = arith.constant 0 : index
    %109 = vector.load %arg2[%c0_58, %c0_59, %108, %c0_60] : memref<1x5x16x16xf32, #tpu.memory_space<vmem>>, vector<1x5x1x16xf32>
    %110 = vector.shape_cast %109 : vector<1x5x1x16xf32> to vector<5x1x16xf32>
    %111 = vector.shape_cast %110 : vector<5x1x16xf32> to vector<5x16xf32>
    %112 = vector.broadcast %105 : f32 to vector<5x16xf32>
    %113 = arith.mulf %111, %112 : vector<5x16xf32>
    %c0_61 = arith.constant 0 : index
    %c237 = arith.constant 237 : index
    %114 = vector.load %arg9[%c0_61, %c237] : memref<8x352xf32, #tpu.memory_space<vmem>>, vector<5x16xf32>
    tpu.vector_store %arg9[%c0_61, %c237], %113 {strides = array<i32>} : memref<8x352xf32, #tpu.memory_space<vmem>>, vector<5x16xf32>,
    %c2_i32_62 = arith.constant 2 : i32
    %115 = arith.subi %0, %c2_i32_62 : i32
    %c7_i32 = arith.constant 7 : i32
    %116 = arith.addi %115, %c7_i32 : i32
    %c0_i32_63 = arith.constant 0 : i32
    %117 = arith.cmpi sge, %116, %c0_i32_63 : i32
    %c16_i32_64 = arith.constant 16 : i32
    %118 = arith.cmpi slt, %116, %c16_i32_64 : i32
    %119 = arith.andi %117, %118 : i1
    %120 = arith.extui %119 : i1 to i32
    %121 = arith.sitofp %120 : i32 to f32
    %c0_i32_65 = arith.constant 0 : i32
    %c15_i32_66 = arith.constant 15 : i32
    %122 = arith.maxsi %c0_i32_65, %116 : i32
    %123 = arith.minsi %c15_i32_66, %122 : i32
    %c0_67 = arith.constant 0 : index
    %c0_68 = arith.constant 0 : index
    %124 = arith.index_cast %123 : i32 to index
    %c0_69 = arith.constant 0 : index
    %125 = vector.load %arg2[%c0_67, %c0_68, %124, %c0_69] : memref<1x5x16x16xf32, #tpu.memory_space<vmem>>, vector<1x5x1x16xf32>
    %126 = vector.shape_cast %125 : vector<1x5x1x16xf32> to vector<5x1x16xf32>
    %127 = vector.shape_cast %126 : vector<5x1x16xf32> to vector<5x16xf32>
    %128 = vector.broadcast %121 : f32 to vector<5x16xf32>
    %129 = arith.mulf %127, %128 : vector<5x16xf32>
    %c0_70 = arith.constant 0 : index
    %c255 = arith.constant 255 : index
    %130 = vector.load %arg9[%c0_70, %c255] : memref<8x352xf32, #tpu.memory_space<vmem>>, vector<5x16xf32>
    tpu.vector_store %arg9[%c0_70, %c255], %129 {strides = array<i32>} : memref<8x352xf32, #tpu.memory_space<vmem>>, vector<5x16xf32>,
    %c2_i32_71 = arith.constant 2 : i32
    %131 = arith.subi %0, %c2_i32_71 : i32
    %c8_i32_72 = arith.constant 8 : i32
    %132 = arith.addi %131, %c8_i32_72 : i32
    %c0_i32_73 = arith.constant 0 : i32
    %133 = arith.cmpi sge, %132, %c0_i32_73 : i32
    %c16_i32_74 = arith.constant 16 : i32
    %134 = arith.cmpi slt, %132, %c16_i32_74 : i32
    %135 = arith.andi %133, %134 : i1
    %136 = arith.extui %135 : i1 to i32
    %137 = arith.sitofp %136 : i32 to f32
    %c0_i32_75 = arith.constant 0 : i32
    %c15_i32_76 = arith.constant 15 : i32
    %138 = arith.maxsi %c0_i32_75, %132 : i32
    %139 = arith.minsi %c15_i32_76, %138 : i32
    %c0_77 = arith.constant 0 : index
    %c0_78 = arith.constant 0 : index
    %140 = arith.index_cast %139 : i32 to index
    %c0_79 = arith.constant 0 : index
    %141 = vector.load %arg2[%c0_77, %c0_78, %140, %c0_79] : memref<1x5x16x16xf32, #tpu.memory_space<vmem>>, vector<1x5x1x16xf32>
    %142 = vector.shape_cast %141 : vector<1x5x1x16xf32> to vector<5x1x16xf32>
    %143 = vector.shape_cast %142 : vector<5x1x16xf32> to vector<5x16xf32>
    %144 = vector.broadcast %137 : f32 to vector<5x16xf32>
    %145 = arith.mulf %143, %144 : vector<5x16xf32>
    %c0_80 = arith.constant 0 : index
    %c273 = arith.constant 273 : index
    %146 = vector.load %arg9[%c0_80, %c273] : memref<8x352xf32, #tpu.memory_space<vmem>>, vector<5x16xf32>
    tpu.vector_store %arg9[%c0_80, %c273], %145 {strides = array<i32>} : memref<8x352xf32, #tpu.memory_space<vmem>>, vector<5x16xf32>,
    %c2_i32_81 = arith.constant 2 : i32
    %147 = arith.subi %0, %c2_i32_81 : i32
    %c9_i32 = arith.constant 9 : i32
    %148 = arith.addi %147, %c9_i32 : i32
    %c0_i32_82 = arith.constant 0 : i32
    %149 = arith.cmpi sge, %148, %c0_i32_82 : i32
    %c16_i32_83 = arith.constant 16 : i32
    %150 = arith.cmpi slt, %148, %c16_i32_83 : i32
    %151 = arith.andi %149, %150 : i1
    %152 = arith.extui %151 : i1 to i32
    %153 = arith.sitofp %152 : i32 to f32
    %c0_i32_84 = arith.constant 0 : i32
    %c15_i32_85 = arith.constant 15 : i32
    %154 = arith.maxsi %c0_i32_84, %148 : i32
    %155 = arith.minsi %c15_i32_85, %154 : i32
    %c0_86 = arith.constant 0 : index
    %c0_87 = arith.constant 0 : index
    %156 = arith.index_cast %155 : i32 to index
    %c0_88 = arith.constant 0 : index
    %157 = vector.load %arg2[%c0_86, %c0_87, %156, %c0_88] : memref<1x5x16x16xf32, #tpu.memory_space<vmem>>, vector<1x5x1x16xf32>
    %158 = vector.shape_cast %157 : vector<1x5x1x16xf32> to vector<5x1x16xf32>
    %159 = vector.shape_cast %158 : vector<5x1x16xf32> to vector<5x16xf32>
    %160 = vector.broadcast %153 : f32 to vector<5x16xf32>
    %161 = arith.mulf %159, %160 : vector<5x16xf32>
    %c0_89 = arith.constant 0 : index
    %c291 = arith.constant 291 : index
    %162 = vector.load %arg9[%c0_89, %c291] : memref<8x352xf32, #tpu.memory_space<vmem>>, vector<5x16xf32>
    tpu.vector_store %arg9[%c0_89, %c291], %161 {strides = array<i32>} : memref<8x352xf32, #tpu.memory_space<vmem>>, vector<5x16xf32>,
    %c2_i32_90 = arith.constant 2 : i32
    %163 = arith.subi %0, %c2_i32_90 : i32
    %c10_i32 = arith.constant 10 : i32
    %164 = arith.addi %163, %c10_i32 : i32
    %c0_i32_91 = arith.constant 0 : i32
    %165 = arith.cmpi sge, %164, %c0_i32_91 : i32
    %c16_i32_92 = arith.constant 16 : i32
    %166 = arith.cmpi slt, %164, %c16_i32_92 : i32
    %167 = arith.andi %165, %166 : i1
    %168 = arith.extui %167 : i1 to i32
    %169 = arith.sitofp %168 : i32 to f32
    %c0_i32_93 = arith.constant 0 : i32
    %c15_i32_94 = arith.constant 15 : i32
    %170 = arith.maxsi %c0_i32_93, %164 : i32
    %171 = arith.minsi %c15_i32_94, %170 : i32
    %c0_95 = arith.constant 0 : index
    %c0_96 = arith.constant 0 : index
    %172 = arith.index_cast %171 : i32 to index
    %c0_97 = arith.constant 0 : index
    %173 = vector.load %arg2[%c0_95, %c0_96, %172, %c0_97] : memref<1x5x16x16xf32, #tpu.memory_space<vmem>>, vector<1x5x1x16xf32>
    %174 = vector.shape_cast %173 : vector<1x5x1x16xf32> to vector<5x1x16xf32>
    %175 = vector.shape_cast %174 : vector<5x1x16xf32> to vector<5x16xf32>
    %176 = vector.broadcast %169 : f32 to vector<5x16xf32>
    %177 = arith.mulf %175, %176 : vector<5x16xf32>
    %c0_98 = arith.constant 0 : index
    %c309 = arith.constant 309 : index
    %178 = vector.load %arg9[%c0_98, %c309] : memref<8x352xf32, #tpu.memory_space<vmem>>, vector<5x16xf32>
    tpu.vector_store %arg9[%c0_98, %c309], %177 {strides = array<i32>} : memref<8x352xf32, #tpu.memory_space<vmem>>, vector<5x16xf32>,
    %c2_i32_99 = arith.constant 2 : i32
    %179 = arith.subi %0, %c2_i32_99 : i32
    %c11_i32 = arith.constant 11 : i32
    %180 = arith.addi %179, %c11_i32 : i32
    %c0_i32_100 = arith.constant 0 : i32
    %181 = arith.cmpi sge, %180, %c0_i32_100 : i32
    %c16_i32_101 = arith.constant 16 : i32
    %182 = arith.cmpi slt, %180, %c16_i32_101 : i32
    %183 = arith.andi %181, %182 : i1
    %184 = arith.extui %183 : i1 to i32
    %185 = arith.sitofp %184 : i32 to f32
    %c0_i32_102 = arith.constant 0 : i32
    %c15_i32_103 = arith.constant 15 : i32
    %186 = arith.maxsi %c0_i32_102, %180 : i32
    %187 = arith.minsi %c15_i32_103, %186 : i32
    %c0_104 = arith.constant 0 : index
    %c0_105 = arith.constant 0 : index
    %188 = arith.index_cast %187 : i32 to index
    %c0_106 = arith.constant 0 : index
    %189 = vector.load %arg2[%c0_104, %c0_105, %188, %c0_106] : memref<1x5x16x16xf32, #tpu.memory_space<vmem>>, vector<1x5x1x16xf32>
    %190 = vector.shape_cast %189 : vector<1x5x1x16xf32> to vector<5x1x16xf32>
    %191 = vector.shape_cast %190 : vector<5x1x16xf32> to vector<5x16xf32>
    %192 = vector.broadcast %185 : f32 to vector<5x16xf32>
    %193 = arith.mulf %191, %192 : vector<5x16xf32>
    %c0_107 = arith.constant 0 : index
    %c327 = arith.constant 327 : index
    %194 = vector.load %arg9[%c0_107, %c327] : memref<8x352xf32, #tpu.memory_space<vmem>>, vector<5x16xf32>
    tpu.vector_store %arg9[%c0_107, %c327], %193 {strides = array<i32>} : memref<8x352xf32, #tpu.memory_space<vmem>>, vector<5x16xf32>,
    %c0_108 = arith.constant 0 : index
    %c127 = arith.constant 127 : index
    %195 = vector.load %arg9[%c0_108, %c127] : memref<8x352xf32, #tpu.memory_space<vmem>>, vector<8x180xf32>
    %c0_109 = arith.constant 0 : index
    %c0_110 = arith.constant 0 : index
    %196 = vector.load %arg10[%c0_109, %c0_110] : memref<72x180xf32, #tpu.memory_space<vmem>>, vector<8x180xf32>
    tpu.vector_store %arg10[%c0_109, %c0_110], %195 {strides = array<i32>} : memref<72x180xf32, #tpu.memory_space<vmem>>, vector<8x180xf32>,
    %c0_111 = arith.constant 0 : index
    %c128 = arith.constant 128 : index
    %197 = vector.load %arg9[%c0_111, %c128] : memref<8x352xf32, #tpu.memory_space<vmem>>, vector<8x180xf32>
    %c8 = arith.constant 8 : index
    %c0_112 = arith.constant 0 : index
    %198 = vector.load %arg10[%c8, %c0_112] : memref<72x180xf32, #tpu.memory_space<vmem>>, vector<8x180xf32>
    tpu.vector_store %arg10[%c8, %c0_112], %197 {strides = array<i32>} : memref<72x180xf32, #tpu.memory_space<vmem>>, vector<8x180xf32>,
    %c0_113 = arith.constant 0 : index
    %c129_114 = arith.constant 129 : index
    %199 = vector.load %arg9[%c0_113, %c129_114] : memref<8x352xf32, #tpu.memory_space<vmem>>, vector<8x180xf32>
    %c16 = arith.constant 16 : index
    %c0_115 = arith.constant 0 : index
    %200 = vector.load %arg10[%c16, %c0_115] : memref<72x180xf32, #tpu.memory_space<vmem>>, vector<8x180xf32>
    tpu.vector_store %arg10[%c16, %c0_115], %199 {strides = array<i32>} : memref<72x180xf32, #tpu.memory_space<vmem>>, vector<8x180xf32>,
    %c0_116 = arith.constant 0 : index
    %c145 = arith.constant 145 : index
    %201 = vector.load %arg9[%c0_116, %c145] : memref<8x352xf32, #tpu.memory_space<vmem>>, vector<8x180xf32>
    %c24 = arith.constant 24 : index
    %c0_117 = arith.constant 0 : index
    %202 = vector.load %arg10[%c24, %c0_117] : memref<72x180xf32, #tpu.memory_space<vmem>>, vector<8x180xf32>
    tpu.vector_store %arg10[%c24, %c0_117], %201 {strides = array<i32>} : memref<72x180xf32, #tpu.memory_space<vmem>>, vector<8x180xf32>,
    %c0_118 = arith.constant 0 : index
    %c146 = arith.constant 146 : index
    %203 = vector.load %arg9[%c0_118, %c146] : memref<8x352xf32, #tpu.memory_space<vmem>>, vector<8x180xf32>
    %c32 = arith.constant 32 : index
    %c0_119 = arith.constant 0 : index
    %204 = vector.load %arg10[%c32, %c0_119] : memref<72x180xf32, #tpu.memory_space<vmem>>, vector<8x180xf32>
    tpu.vector_store %arg10[%c32, %c0_119], %203 {strides = array<i32>} : memref<72x180xf32, #tpu.memory_space<vmem>>, vector<8x180xf32>,
    %c0_120 = arith.constant 0 : index
    %c147_121 = arith.constant 147 : index
    %205 = vector.load %arg9[%c0_120, %c147_121] : memref<8x352xf32, #tpu.memory_space<vmem>>, vector<8x180xf32>
    %c40 = arith.constant 40 : index
    %c0_122 = arith.constant 0 : index
    %206 = vector.load %arg10[%c40, %c0_122] : memref<72x180xf32, #tpu.memory_space<vmem>>, vector<8x180xf32>
    tpu.vector_store %arg10[%c40, %c0_122], %205 {strides = array<i32>} : memref<72x180xf32, #tpu.memory_space<vmem>>, vector<8x180xf32>,
    %c0_123 = arith.constant 0 : index
    %c163 = arith.constant 163 : index
    %207 = vector.load %arg9[%c0_123, %c163] : memref<8x352xf32, #tpu.memory_space<vmem>>, vector<8x180xf32>
    %c48 = arith.constant 48 : index
    %c0_124 = arith.constant 0 : index
    %208 = vector.load %arg10[%c48, %c0_124] : memref<72x180xf32, #tpu.memory_space<vmem>>, vector<8x180xf32>
    tpu.vector_store %arg10[%c48, %c0_124], %207 {strides = array<i32>} : memref<72x180xf32, #tpu.memory_space<vmem>>, vector<8x180xf32>,
    %c0_125 = arith.constant 0 : index
    %c164 = arith.constant 164 : index
    %209 = vector.load %arg9[%c0_125, %c164] : memref<8x352xf32, #tpu.memory_space<vmem>>, vector<8x180xf32>
    %c56 = arith.constant 56 : index
    %c0_126 = arith.constant 0 : index
    %210 = vector.load %arg10[%c56, %c0_126] : memref<72x180xf32, #tpu.memory_space<vmem>>, vector<8x180xf32>
    tpu.vector_store %arg10[%c56, %c0_126], %209 {strides = array<i32>} : memref<72x180xf32, #tpu.memory_space<vmem>>, vector<8x180xf32>,
    %c0_127 = arith.constant 0 : index
    %c165_128 = arith.constant 165 : index
    %211 = vector.load %arg9[%c0_127, %c165_128] : memref<8x352xf32, #tpu.memory_space<vmem>>, vector<8x180xf32>
    %c64 = arith.constant 64 : index
    %c0_129 = arith.constant 0 : index
    %212 = vector.load %arg10[%c64, %c0_129] : memref<72x180xf32, #tpu.memory_space<vmem>>, vector<8x180xf32>
    tpu.vector_store %arg10[%c64, %c0_129], %211 {strides = array<i32>} : memref<72x180xf32, #tpu.memory_space<vmem>>, vector<8x180xf32>,
    %c0_130 = arith.constant 0 : index
    %c0_131 = arith.constant 0 : index
    %213 = vector.load %arg3[%c0_130, %c0_131] : memref<64x72xf32, #tpu.memory_space<vmem>>, vector<64x72xf32>
    %c0_132 = arith.constant 0 : index
    %c0_133 = arith.constant 0 : index
    %214 = vector.load %arg10[%c0_132, %c0_133] : memref<72x180xf32, #tpu.memory_space<vmem>>, vector<72x180xf32>
    %cst_134 = arith.constant dense<0.000000e+00> : vector<64x180xf32>
    %215 = tpu.matmul %213, %214, %cst_134 {dimension_numbers = #tpu.dot_dimension_numbers<[1], [0], [0], [1], [0, 0, 1, 1], [], []>} : vector<64x72xf32>, vector<72x180xf32>, vector<64x180xf32> -> vector<64x180xf32>
    %c0_135 = arith.constant 0 : index
    %c0_136 = arith.constant 0 : index
    %216 = vector.load %arg4[%c0_135, %c0_136] : memref<64x1xf32, #tpu.memory_space<vmem>>, vector<64x1xf32>
    %217 = vector.broadcast %216 : vector<64x1xf32> to vector<64x180xf32>
    %218 = arith.addf %215, %217 : vector<64x180xf32>
    %cst_137 = arith.constant 0.000000e+00 : f32
    %219 = vector.broadcast %cst_137 : f32 to vector<64x180xf32>
    %220 = arith.maximumf %218, %219 : vector<64x180xf32>
    %221 = tpu.iota {dimensions = array<i32: 1>} : vector<1x180xi32>
    %c1_i32_138 = arith.constant 1 : i32
    %222 = arith.subi %c1_i32_138, %0 : i32
    %c18_i32 = arith.constant 18 : i32
    %223 = arith.muli %222, %c18_i32 : i32
    %c17_i32 = arith.constant 17 : i32
    %224 = arith.subi %c17_i32, %0 : i32
    %c18_i32_139 = arith.constant 18 : i32
    %225 = arith.muli %224, %c18_i32_139 : i32
    %226 = vector.broadcast %223 : i32 to vector<1x180xi32>
    %227 = arith.cmpi sge, %221, %226 : vector<1x180xi32>
    %228 = vector.broadcast %225 : i32 to vector<1x180xi32>
    %229 = arith.cmpi slt, %221, %228 : vector<1x180xi32>
    %230 = arith.andi %227, %229 : vector<1x180xi1>
    %cst_140 = arith.constant 0.000000e+00 : f32
    %231 = vector.shape_cast %230 : vector<1x180xi1> to vector<1x180xi1>
    %232 = vector.broadcast %231 : vector<1x180xi1> to vector<64x180xi1>
    %233 = vector.broadcast %cst_140 : f32 to vector<64x180xf32>
    %234 = arith.select %232, %220, %233 : vector<64x180xi1>, vector<64x180xf32>
    %c0_141 = arith.constant 0 : index
    %c0_142 = arith.constant 0 : index
    %235 = vector.load %arg7[%c0_141, %c0_142] : memref<1x180xf32, #tpu.memory_space<vmem>>, vector<1x180xf32>
    %236 = vector.broadcast %235 : vector<1x180xf32> to vector<64x180xf32>
    %237 = arith.mulf %234, %236 : vector<64x180xf32>
    %cst_143 = arith.constant 0.000000e+00 : bf16
    %238 = vector.broadcast %cst_143 : bf16 to vector<64x128xbf16>
    %c0_144 = arith.constant 0 : index
    %c0_145 = arith.constant 0 : index
    %239 = vector.load %arg11[%c0_144, %c0_145] : memref<64x316xbf16, #tpu.memory_space<vmem>>, vector<64x128xbf16>
    tpu.vector_store %arg11[%c0_144, %c0_145], %238 {strides = array<i32>} : memref<64x316xbf16, #tpu.memory_space<vmem>>, vector<64x128xbf16>,
    %cst_146 = arith.constant 0.000000e+00 : bf16
    %240 = vector.broadcast %cst_146 : bf16 to vector<64x8xbf16>
    %c0_147 = arith.constant 0 : index
    %c308 = arith.constant 308 : index
    %241 = vector.load %arg11[%c0_147, %c308] : memref<64x316xbf16, #tpu.memory_space<vmem>>, vector<64x8xbf16>
    tpu.vector_store %arg11[%c0_147, %c308], %240 {strides = array<i32>} : memref<64x316xbf16, #tpu.memory_space<vmem>>, vector<64x8xbf16>,
    %242 = arith.truncf %237 : vector<64x180xf32> to vector<64x180xbf16>
    %c0_148 = arith.constant 0 : index
    %c128_149 = arith.constant 128 : index
    %243 = vector.load %arg11[%c0_148, %c128_149] : memref<64x316xbf16, #tpu.memory_space<vmem>>, vector<64x180xbf16>
    tpu.vector_store %arg11[%c0_148, %c128_149], %242 {strides = array<i32>} : memref<64x316xbf16, #tpu.memory_space<vmem>>, vector<64x180xbf16>,
    %cst_150 = arith.constant 0.000000e+00 : f32
    %244 = vector.broadcast %cst_150 : f32 to vector<2x144xf32>
    %c0_151 = arith.constant 0 : index
    %c0_152 = arith.constant 0 : index
    %245 = vector.load %arg6[%c0_151, %c0_152] : memref<2x1xf32, #tpu.memory_space<vmem>>, vector<2x1xf32>
    %246 = vector.broadcast %245 : vector<2x1xf32> to vector<2x144xf32>
    %247 = arith.addf %244, %246 : vector<2x144xf32>
    %c0_153 = arith.constant 0 : index
    %c0_154 = arith.constant 0 : index
    %c0_155 = arith.constant 0 : index
    %248 = vector.load %arg5[%c0_153, %c0_154, %c0_155] : memref<3x6x64xbf16, #tpu.memory_space<vmem>>, vector<1x6x64xbf16>
    %249 = vector.shape_cast %248 : vector<1x6x64xbf16> to vector<6x64xbf16>
    %c0_156 = arith.constant 0 : index
    %c127_157 = arith.constant 127 : index
    %250 = vector.load %arg11[%c0_156, %c127_157] : memref<64x316xbf16, #tpu.memory_space<vmem>>, vector<64x146xbf16>
    %cst_158 = arith.constant dense<0.000000e+00> : vector<6x146xf32>
    %251 = tpu.matmul %249, %250, %cst_158 {dimension_numbers = #tpu.dot_dimension_numbers<[1], [0], [0], [1], [0, 0, 1, 1], [], []>} : vector<6x64xbf16>, vector<64x146xbf16>, vector<6x146xf32> -> vector<6x146xf32>
    %252 = vector.extract_strided_slice %251 {offsets = [0, 0], sizes = [2, 144], strides = [1, 1]} : vector<6x146xf32> to vector<2x144xf32>
    %253 = arith.addf %247, %252 : vector<2x144xf32>
    %254 = vector.extract_strided_slice %251 {offsets = [2, 1], sizes = [2, 144], strides = [1, 1]} : vector<6x146xf32> to vector<2x144xf32>
    %255 = arith.addf %253, %254 : vector<2x144xf32>
    %256 = vector.extract_strided_slice %251 {offsets = [4, 2], sizes = [2, 144], strides = [1, 1]} : vector<6x146xf32> to vector<2x144xf32>
    %257 = arith.addf %255, %256 : vector<2x144xf32>
    %c1 = arith.constant 1 : index
    %c0_159 = arith.constant 0 : index
    %c0_160 = arith.constant 0 : index
    %258 = vector.load %arg5[%c1, %c0_159, %c0_160] : memref<3x6x64xbf16, #tpu.memory_space<vmem>>, vector<1x6x64xbf16>
    %259 = vector.shape_cast %258 : vector<1x6x64xbf16> to vector<6x64xbf16>
    %c0_161 = arith.constant 0 : index
    %c145_162 = arith.constant 145 : index
    %260 = vector.load %arg11[%c0_161, %c145_162] : memref<64x316xbf16, #tpu.memory_space<vmem>>, vector<64x146xbf16>
    %cst_163 = arith.constant dense<0.000000e+00> : vector<6x146xf32>
    %261 = tpu.matmul %259, %260, %cst_163 {dimension_numbers = #tpu.dot_dimension_numbers<[1], [0], [0], [1], [0, 0, 1, 1], [], []>} : vector<6x64xbf16>, vector<64x146xbf16>, vector<6x146xf32> -> vector<6x146xf32>
    %262 = vector.extract_strided_slice %261 {offsets = [0, 0], sizes = [2, 144], strides = [1, 1]} : vector<6x146xf32> to vector<2x144xf32>
    %263 = arith.addf %257, %262 : vector<2x144xf32>
    %264 = vector.extract_strided_slice %261 {offsets = [2, 1], sizes = [2, 144], strides = [1, 1]} : vector<6x146xf32> to vector<2x144xf32>
    %265 = arith.addf %263, %264 : vector<2x144xf32>
    %266 = vector.extract_strided_slice %261 {offsets = [4, 2], sizes = [2, 144], strides = [1, 1]} : vector<6x146xf32> to vector<2x144xf32>
    %267 = arith.addf %265, %266 : vector<2x144xf32>
    %c2 = arith.constant 2 : index
    %c0_164 = arith.constant 0 : index
    %c0_165 = arith.constant 0 : index
    %268 = vector.load %arg5[%c2, %c0_164, %c0_165] : memref<3x6x64xbf16, #tpu.memory_space<vmem>>, vector<1x6x64xbf16>
    %269 = vector.shape_cast %268 : vector<1x6x64xbf16> to vector<6x64xbf16>
    %c0_166 = arith.constant 0 : index
    %c163_167 = arith.constant 163 : index
    %270 = vector.load %arg11[%c0_166, %c163_167] : memref<64x316xbf16, #tpu.memory_space<vmem>>, vector<64x146xbf16>
    %cst_168 = arith.constant dense<0.000000e+00> : vector<6x146xf32>
    %271 = tpu.matmul %269, %270, %cst_168 {dimension_numbers = #tpu.dot_dimension_numbers<[1], [0], [0], [1], [0, 0, 1, 1], [], []>} : vector<6x64xbf16>, vector<64x146xbf16>, vector<6x146xf32> -> vector<6x146xf32>
    %272 = vector.extract_strided_slice %271 {offsets = [0, 0], sizes = [2, 144], strides = [1, 1]} : vector<6x146xf32> to vector<2x144xf32>
    %273 = arith.addf %267, %272 : vector<2x144xf32>
    %274 = vector.extract_strided_slice %271 {offsets = [2, 1], sizes = [2, 144], strides = [1, 1]} : vector<6x146xf32> to vector<2x144xf32>
    %275 = arith.addf %273, %274 : vector<2x144xf32>
    %276 = vector.extract_strided_slice %271 {offsets = [4, 2], sizes = [2, 144], strides = [1, 1]} : vector<6x146xf32> to vector<2x144xf32>
    %277 = arith.addf %275, %276 : vector<2x144xf32>
    %278 = vector.extract_strided_slice %277 {offsets = [0, 1], sizes = [2, 16], strides = [1, 1]} : vector<2x144xf32> to vector<2x16xf32>
    %c0_169 = arith.constant 0 : index
    %c0_170 = arith.constant 0 : index
    %c0_171 = arith.constant 0 : index
    %279 = vector.load %arg8[%c0_169, %c0_170, %c0_171] : memref<1x2x128xf32, #tpu.memory_space<vmem>>, vector<1x2x16xf32>
    %280 = vector.shape_cast %279 : vector<1x2x16xf32> to vector<2x16xf32>
    %281 = vector.shape_cast %278 : vector<2x16xf32> to vector<1x2x16xf32>
    tpu.vector_store %arg8[%c0_169, %c0_170, %c0_171], %281 {strides = array<i32>} : memref<1x2x128xf32, #tpu.memory_space<vmem>>, vector<1x2x16xf32>,
    %282 = vector.extract_strided_slice %277 {offsets = [0, 19], sizes = [2, 16], strides = [1, 1]} : vector<2x144xf32> to vector<2x16xf32>
    %c0_172 = arith.constant 0 : index
    %c0_173 = arith.constant 0 : index
    %c16_174 = arith.constant 16 : index
    %283 = vector.load %arg8[%c0_172, %c0_173, %c16_174] : memref<1x2x128xf32, #tpu.memory_space<vmem>>, vector<1x2x16xf32>
    %284 = vector.shape_cast %283 : vector<1x2x16xf32> to vector<2x16xf32>
    %285 = vector.shape_cast %282 : vector<2x16xf32> to vector<1x2x16xf32>
    tpu.vector_store %arg8[%c0_172, %c0_173, %c16_174], %285 {strides = array<i32>} : memref<1x2x128xf32, #tpu.memory_space<vmem>>, vector<1x2x16xf32>,
    %286 = vector.extract_strided_slice %277 {offsets = [0, 37], sizes = [2, 16], strides = [1, 1]} : vector<2x144xf32> to vector<2x16xf32>
    %c0_175 = arith.constant 0 : index
    %c0_176 = arith.constant 0 : index
    %c32_177 = arith.constant 32 : index
    %287 = vector.load %arg8[%c0_175, %c0_176, %c32_177] : memref<1x2x128xf32, #tpu.memory_space<vmem>>, vector<1x2x16xf32>
    %288 = vector.shape_cast %287 : vector<1x2x16xf32> to vector<2x16xf32>
    %289 = vector.shape_cast %286 : vector<2x16xf32> to vector<1x2x16xf32>
    tpu.vector_store %arg8[%c0_175, %c0_176, %c32_177], %289 {strides = array<i32>} : memref<1x2x128xf32, #tpu.memory_space<vmem>>, vector<1x2x16xf32>,
    %290 = vector.extract_strided_slice %277 {offsets = [0, 55], sizes = [2, 16], strides = [1, 1]} : vector<2x144xf32> to vector<2x16xf32>
    %c0_178 = arith.constant 0 : index
    %c0_179 = arith.constant 0 : index
    %c48_180 = arith.constant 48 : index
    %291 = vector.load %arg8[%c0_178, %c0_179, %c48_180] : memref<1x2x128xf32, #tpu.memory_space<vmem>>, vector<1x2x16xf32>
    %292 = vector.shape_cast %291 : vector<1x2x16xf32> to vector<2x16xf32>
    %293 = vector.shape_cast %290 : vector<2x16xf32> to vector<1x2x16xf32>
    tpu.vector_store %arg8[%c0_178, %c0_179, %c48_180], %293 {strides = array<i32>} : memref<1x2x128xf32, #tpu.memory_space<vmem>>, vector<1x2x16xf32>,
    %294 = vector.extract_strided_slice %277 {offsets = [0, 73], sizes = [2, 16], strides = [1, 1]} : vector<2x144xf32> to vector<2x16xf32>
    %c0_181 = arith.constant 0 : index
    %c0_182 = arith.constant 0 : index
    %c64_183 = arith.constant 64 : index
    %295 = vector.load %arg8[%c0_181, %c0_182, %c64_183] : memref<1x2x128xf32, #tpu.memory_space<vmem>>, vector<1x2x16xf32>
    %296 = vector.shape_cast %295 : vector<1x2x16xf32> to vector<2x16xf32>
    %297 = vector.shape_cast %294 : vector<2x16xf32> to vector<1x2x16xf32>
    tpu.vector_store %arg8[%c0_181, %c0_182, %c64_183], %297 {strides = array<i32>} : memref<1x2x128xf32, #tpu.memory_space<vmem>>, vector<1x2x16xf32>,
    %298 = vector.extract_strided_slice %277 {offsets = [0, 91], sizes = [2, 16], strides = [1, 1]} : vector<2x144xf32> to vector<2x16xf32>
    %c0_184 = arith.constant 0 : index
    %c0_185 = arith.constant 0 : index
    %c80 = arith.constant 80 : index
    %299 = vector.load %arg8[%c0_184, %c0_185, %c80] : memref<1x2x128xf32, #tpu.memory_space<vmem>>, vector<1x2x16xf32>
    %300 = vector.shape_cast %299 : vector<1x2x16xf32> to vector<2x16xf32>
    %301 = vector.shape_cast %298 : vector<2x16xf32> to vector<1x2x16xf32>
    tpu.vector_store %arg8[%c0_184, %c0_185, %c80], %301 {strides = array<i32>} : memref<1x2x128xf32, #tpu.memory_space<vmem>>, vector<1x2x16xf32>,
    %302 = vector.extract_strided_slice %277 {offsets = [0, 109], sizes = [2, 16], strides = [1, 1]} : vector<2x144xf32> to vector<2x16xf32>
    %c0_186 = arith.constant 0 : index
    %c0_187 = arith.constant 0 : index
    %c96 = arith.constant 96 : index
    %303 = vector.load %arg8[%c0_186, %c0_187, %c96] : memref<1x2x128xf32, #tpu.memory_space<vmem>>, vector<1x2x16xf32>
    %304 = vector.shape_cast %303 : vector<1x2x16xf32> to vector<2x16xf32>
    %305 = vector.shape_cast %302 : vector<2x16xf32> to vector<1x2x16xf32>
    tpu.vector_store %arg8[%c0_186, %c0_187, %c96], %305 {strides = array<i32>} : memref<1x2x128xf32, #tpu.memory_space<vmem>>, vector<1x2x16xf32>,
    %306 = vector.extract_strided_slice %277 {offsets = [0, 127], sizes = [2, 16], strides = [1, 1]} : vector<2x144xf32> to vector<2x16xf32>
    %c0_188 = arith.constant 0 : index
    %c0_189 = arith.constant 0 : index
    %c112 = arith.constant 112 : index
    %307 = vector.load %arg8[%c0_188, %c0_189, %c112] : memref<1x2x128xf32, #tpu.memory_space<vmem>>, vector<1x2x16xf32>
    %308 = vector.shape_cast %307 : vector<1x2x16xf32> to vector<2x16xf32>
    %309 = vector.shape_cast %306 : vector<2x16xf32> to vector<1x2x16xf32>
    tpu.vector_store %arg8[%c0_188, %c0_189, %c112], %309 {strides = array<i32>} : memref<1x2x128xf32, #tpu.memory_space<vmem>>, vector<1x2x16xf32>,
    return
  }
  func.func @transform_0(%arg0: i32, %arg1: i32) -> (i32, i32, i32, i32) {
    %c0_i32 = arith.constant 0 : i32
    %c0_i32_0 = arith.constant 0 : i32
    %c0_i32_1 = arith.constant 0 : i32
    %c0_i32_2 = arith.constant 0 : i32
    return %arg0, %c0_i32, %c0_i32_0, %c0_i32_1 : i32, i32, i32, i32
  }
  func.func @transform_1(%arg0: i32, %arg1: i32) -> (i32, i32) {
    %c0_i32 = arith.constant 0 : i32
    %c0_i32_0 = arith.constant 0 : i32
    %c0_i32_1 = arith.constant 0 : i32
    return %c0_i32, %c0_i32_0 : i32, i32
  }
  func.func @transform_2(%arg0: i32, %arg1: i32) -> (i32, i32) {
    %c0_i32 = arith.constant 0 : i32
    %c0_i32_0 = arith.constant 0 : i32
    %c0_i32_1 = arith.constant 0 : i32
    return %c0_i32, %c0_i32_0 : i32, i32
  }
  func.func @transform_3(%arg0: i32, %arg1: i32) -> (i32, i32, i32) {
    %c0_i32 = arith.constant 0 : i32
    %c0_i32_0 = arith.constant 0 : i32
    %c0_i32_1 = arith.constant 0 : i32
    %c0_i32_2 = arith.constant 0 : i32
    return %c0_i32, %c0_i32_0, %c0_i32_1 : i32, i32, i32
  }
  func.func @transform_4(%arg0: i32, %arg1: i32) -> (i32, i32) {
    %c0_i32 = arith.constant 0 : i32
    %c0_i32_0 = arith.constant 0 : i32
    %c0_i32_1 = arith.constant 0 : i32
    return %c0_i32, %c0_i32_0 : i32, i32
  }
  func.func @transform_5(%arg0: i32, %arg1: i32) -> (i32, i32) {
    %c0_i32 = arith.constant 0 : i32
    %c0_i32_0 = arith.constant 0 : i32
    %c0_i32_1 = arith.constant 0 : i32
    return %c0_i32, %c0_i32_0 : i32, i32
  }
  func.func @transform_6(%arg0: i32, %arg1: i32) -> (i32, i32, i32) {
    %c0_i32 = arith.constant 0 : i32
    %c0_i32_0 = arith.constant 0 : i32
    return %arg0, %c0_i32, %arg1 : i32, i32, i32
  }
}

</mosaic_0001>

<llo_original>
// kernel: tpu_custom_call.1
$region0: #{tpu_custom_call.1}
  #allocation0 [shape = 'u32[]', space=smem, size = 0x4, offset = 0x4, fixed_abs, tag = 'smem constant byte address 0x4 - core index']
  #allocation1 [shape = 'u32[144,128]{1,0:T(1,128)}', space=vmem, size = 0x12000, scoped, tag = 'internal scratch']
  #allocation2 [shape = 'f32[8,352]{1,0:T(8,128)}', space=vmem, size = 0x3000, scoped, tag = 'scratch operand']
  #allocation3 [shape = 'f32[72,180]{1,0:T(8,128)}', space=vmem, size = 0x12000, scoped, tag = 'scratch operand']
  #allocation4 [shape = 'bf16[64,316]{1,0:T(16,128)(2,1)}', space=vmem, size = 0xc000, scoped, tag = 'scratch operand']
  %s0 = inlined_call_operand.hbm [shape: f32[2,5,16,16], index: 0, kind: input, shape index: {}]
  %s1 = inlined_call_operand.vmem [shape: f32[64,72], index: 1, kind: input, shape index: {}]
  %s2 = inlined_call_operand.vmem [shape: f32[64,1], index: 2, kind: input, shape index: {}]
  %s3 = inlined_call_operand.vmem [shape: bf16[3,6,64], index: 3, kind: input, shape index: {}]
  %s4 = inlined_call_operand.vmem [shape: f32[2,1], index: 4, kind: input, shape index: {}]
  %s5 = inlined_call_operand.vmem [shape: f32[1,180], index: 5, kind: input, shape index: {}]
  %s6 = inlined_call_operand.hbm [shape: f32[2,2,256], index: 6, kind: output, shape index: {}]
  %s7 = sld [smem:[#allocation0]]
  $region61: #{tpu_custom_call.1} parent=0
    _
  %s9 = ssub.s32 1, %s7
  %s10 = scalar_select 0, %s9, %s7
  $region1: #{tpu_custom_call.1} parent=0
    #allocation5 [shape = 'u8[81920]{0}', space=vmem, size = 0x14000, scoped, tag = 'input window, operand 0']
    #allocation6 [shape = 's32[2]{0}', space=sflag, size = 0x8, scoped, tag = 'scoped memory for tpu_custom_call.1']
    #allocation7 [shape = 's32[2]{0}', space=sflag, size = 0x8, scoped, tag = 'scoped memory for tpu_custom_call.1']
    #allocation8 [shape = 'u8[2048]{0}', space=vmem, size = 0x800, scoped, tag = 'output window, operand 0']
    %11 = vsyncpa [#allocation6], 0
    %s12 = scalar_lea.sflag [#allocation6], 1
    %13 = vsyncpa %s12, 0
    %14 = vsyncpa [#allocation7], 0
    %s15 = scalar_lea.sflag [#allocation7], 1
    %16 = vsyncpa %s15, 0
    loop: start=0, step=1, limit=6
    $region2: #{tpu_custom_call.1} parent=1 // loop_pre_header
      _
    $region3: #{tpu_custom_call.1} parent=1 // loop_header
      %s18 = sphi 0, %s22
      %p19 = scmp.ge.s32.totalorder %s18, 6
      %s25 = sphi 0, %s37
      %s26 = sphi 0, %s33
      %s27 = sphi 0, %s25
      %s28 = sphi 0, %s26
      %s29 = sphi 0, %s27
      %s30 = sphi 0, %s28
      %s40 = sphi 0, %s42
      %s43 = sphi 0, %s40
      %s44 = sphi 0, %s43
      %s60 = sphi 0, %s44
      %s64 = sphi 0, %s64
      %s66 = sphi 0, %s64
      %s67 = sphi 0, %s66
      %s81 = sphi 0, %s67
      %s85 = sphi 0, %s85
      %s87 = sphi 0, %s85
      %s88 = sphi 0, %s87
      %s102 = sphi 0, %s88
      %s106 = sphi 0, %s106
      %s108 = sphi 0, %s106
      %s109 = sphi 0, %s108
      %s123 = sphi 0, %s109
      %s127 = sphi 0, %s127
      %s129 = sphi 0, %s127
      %s130 = sphi 0, %s129
      %s144 = sphi 0, %s130
      %s148 = sphi 0, %s148
      %s150 = sphi 0, %s148
      %s151 = sphi 0, %s150
      %s165 = sphi 0, %s151
      %s173 = sphi 0, %s175
      %s176 = sphi 0, %s173
      %s177 = sphi 0, %s176
      %s193 = sphi 0, %s177
    $region4: #{tpu_custom_call.1} parent=1 // loop_header_branch
      %21 = sbr.rel (%p19) target = $region8
    $region5: #{tpu_custom_call.1} parent=1 // loop_body
      %s23 = ssub.s32 %s18, 1
      %s24 = ssub.s32 %s18, 2
      %s31 = sadd.s32 1, %s26
      %p32 = scmp.ge.s32.totalorder %s31, 2
      %s33 = scalar_select %p32, 0, %s31
      %s34 = sadd.s32 1, %s25
      %s35 = scalar_select %p32, %s34, %s25
      %p36 = scmp.ge.s32.totalorder %s35, 2
      %s37 = scalar_select %p36, 0, %s35
      %s38 = ssub.s32 %s25, %s37
      %p39 = scmp.eq.s32.totalorder %s38, 0
      %s41 = sadd.s32 %s40, 1
      %s42 = scalar_select %p39, %s40, %s41
      %p45 = pneg %p39
      %p46 = scmp.eq.s32.totalorder %s18, 3
      %p47 = por %p45, %p46
      %p48 = scmp.ne.s32.totalorder %s40, %s43
      %p49 = scmp.eq.s32.totalorder %s18, 0
      %p50 = por %p48, %p49
      %p51 = scmp.ne.s32.totalorder %s40, %s43
      %p52 = scmp.eq.s32.totalorder %s23, 3
      %p53 = por %p51, %p52
      %p54 = scmp.ne.s32.totalorder %s43, %s44
      %p55 = scmp.eq.s32.totalorder %s23, 0
      %p56 = por %p54, %p55
      %p57 = scmp.ne.s32.totalorder %s43, %s44
      %p58 = scmp.eq.s32.totalorder %s24, 3
      %p59 = por %p57, %p58
      %p61 = scmp.ne.s32.totalorder %s44, %s60
      %p62 = scmp.eq.s32.totalorder %s24, 0
      %p63 = por %p61, %p62
      %s65 = sadd.s32 %s64, 1
      %p68 = scmp.eq.s32.totalorder %s18, 3
      %p69 = scmp.ne.s32.totalorder %s64, %s66
      %p70 = scmp.eq.s32.totalorder %s18, 0
      %p71 = por %p69, %p70
      %p72 = scmp.ne.s32.totalorder %s64, %s66
      %p73 = scmp.eq.s32.totalorder %s23, 3
      %p74 = por %p72, %p73
      %p75 = scmp.ne.s32.totalorder %s66, %s67
      %p76 = scmp.eq.s32.totalorder %s23, 0
      %p77 = por %p75, %p76
      %p78 = scmp.ne.s32.totalorder %s66, %s67
      %p79 = scmp.eq.s32.totalorder %s24, 3
      %p80 = por %p78, %p79
      %p82 = scmp.ne.s32.totalorder %s67, %s81
      %p83 = scmp.eq.s32.totalorder %s24, 0
      %p84 = por %p82, %p83
      %s86 = sadd.s32 %s85, 1
      %p89 = scmp.eq.s32.totalorder %s18, 3
      %p90 = scmp.ne.s32.totalorder %s85, %s87
      %p91 = scmp.eq.s32.totalorder %s18, 0
      %p92 = por %p90, %p91
      %p93 = scmp.ne.s32.totalorder %s85, %s87
      %p94 = scmp.eq.s32.totalorder %s23, 3
      %p95 = por %p93, %p94
      %p96 = scmp.ne.s32.totalorder %s87, %s88
      %p97 = scmp.eq.s32.totalorder %s23, 0
      %p98 = por %p96, %p97
      %p99 = scmp.ne.s32.totalorder %s87, %s88
      %p100 = scmp.eq.s32.totalorder %s24, 3
      %p101 = por %p99, %p100
      %p103 = scmp.ne.s32.totalorder %s88, %s102
      %p104 = scmp.eq.s32.totalorder %s24, 0
      %p105 = por %p103, %p104
      %s107 = sadd.s32 %s106, 1
      %p110 = scmp.eq.s32.totalorder %s18, 3
      %p111 = scmp.ne.s32.totalorder %s106, %s108
      %p112 = scmp.eq.s32.totalorder %s18, 0
      %p113 = por %p111, %p112
      %p114 = scmp.ne.s32.totalorder %s106, %s108
      %p115 = scmp.eq.s32.totalorder %s23, 3
      %p116 = por %p114, %p115
      %p117 = scmp.ne.s32.totalorder %s108, %s109
      %p118 = scmp.eq.s32.totalorder %s23, 0
      %p119 = por %p117, %p118
      %p120 = scmp.ne.s32.totalorder %s108, %s109
      %p121 = scmp.eq.s32.totalorder %s24, 3
      %p122 = por %p120, %p121
      %p124 = scmp.ne.s32.totalorder %s109, %s123
      %p125 = scmp.eq.s32.totalorder %s24, 0
      %p126 = por %p124, %p125
      %s128 = sadd.s32 %s127, 1
      %p131 = scmp.eq.s32.totalorder %s18, 3
      %p132 = scmp.ne.s32.totalorder %s127, %s129
      %p133 = scmp.eq.s32.totalorder %s18, 0
      %p134 = por %p132, %p133
      %p135 = scmp.ne.s32.totalorder %s127, %s129
      %p136 = scmp.eq.s32.totalorder %s23, 3
      %p137 = por %p135, %p136
      %p138 = scmp.ne.s32.totalorder %s129, %s130
      %p139 = scmp.eq.s32.totalorder %s23, 0
      %p140 = por %p138, %p139
      %p141 = scmp.ne.s32.totalorder %s129, %s130
      %p142 = scmp.eq.s32.totalorder %s24, 3
      %p143 = por %p141, %p142
      %p145 = scmp.ne.s32.totalorder %s130, %s144
      %p146 = scmp.eq.s32.totalorder %s24, 0
      %p147 = por %p145, %p146
      %s149 = sadd.s32 %s148, 1
      %p152 = scmp.eq.s32.totalorder %s18, 3
      %p153 = scmp.ne.s32.totalorder %s148, %s150
      %p154 = scmp.eq.s32.totalorder %s18, 0
      %p155 = por %p153, %p154
      %p156 = scmp.ne.s32.totalorder %s148, %s150
      %p157 = scmp.eq.s32.totalorder %s23, 3
      %p158 = por %p156, %p157
      %p159 = scmp.ne.s32.totalorder %s150, %s151
      %p160 = scmp.eq.s32.totalorder %s23, 0
      %p161 = por %p159, %p160
      %p162 = scmp.ne.s32.totalorder %s150, %s151
      %p163 = scmp.eq.s32.totalorder %s24, 3
      %p164 = por %p162, %p163
      %p166 = scmp.ne.s32.totalorder %s151, %s165
      %p167 = scmp.eq.s32.totalorder %s24, 0
      %p168 = por %p166, %p167
      %s169 = ssub.s32 %s25, %s37
      %s170 = ssub.s32 %s26, %s33
      %s171 = sor.u32 %s169, %s170
      %p172 = scmp.eq.s32.totalorder %s171, 0
      %s174 = sadd.s32 %s173, 1
      %s175 = scalar_select %p172, %s173, %s174
      %p178 = pneg %p172
      %p179 = scmp.eq.s32.totalorder %s18, 3
      %p180 = por %p178, %p179
      %p181 = scmp.ne.s32.totalorder %s173, %s176
      %p182 = scmp.eq.s32.totalorder %s18, 0
      %p183 = por %p181, %p182
      %p184 = scmp.ne.s32.totalorder %s173, %s176
      %p185 = scmp.eq.s32.totalorder %s23, 3
      %p186 = por %p184, %p185
      %p187 = scmp.ne.s32.totalorder %s176, %s177
      %p188 = scmp.eq.s32.totalorder %s23, 0
      %p189 = por %p187, %p188
      %p190 = scmp.ne.s32.totalorder %s176, %s177
      %p191 = scmp.eq.s32.totalorder %s24, 3
      %p192 = por %p190, %p191
      %p194 = scmp.ne.s32.totalorder %s177, %s193
      %p195 = scmp.eq.s32.totalorder %s24, 0
      %p196 = por %p194, %p195
      %p197 = scmp.le.s32.totalorder 1, %s18
      %p198 = scmp.lt.s32.totalorder %s18, 5
      %p199 = pnand %p197, %p198
      %p200 = pneg %p199
      // Predicated region
      $region9: #{tpu_custom_call.1} parent=5 // pred_check
        _
      $region10: #{tpu_custom_call.1} parent=5 // pred_check_branch
        %202 = sbr.rel (%p199) target = $region12
      $region11: #{tpu_custom_call.1} parent=5 // pred_region
        %s203 = ssub.s32 %s18, 1
        // Predicated region
        $region13: #{tpu_custom_call.1} parent=11 // pred_check
          %p204 = pneg %p77
        $region14: #{tpu_custom_call.1} parent=11 // pred_check_branch
          %206 = sbr.rel (%p204) target = $region16
        $region15: #{tpu_custom_call.1} parent=11 // pred_region
          _
        $region16: #{tpu_custom_call.1} parent=11 // pred_fallthru
          _
        // Predicated region
        $region17: #{tpu_custom_call.1} parent=11 // pred_check
          %p207 = pneg %p98
        $region18: #{tpu_custom_call.1} parent=11 // pred_check_branch
          %209 = sbr.rel (%p207) target = $region20
        $region19: #{tpu_custom_call.1} parent=11 // pred_region
          _
        $region20: #{tpu_custom_call.1} parent=11 // pred_fallthru
          _
        // Predicated region
        $region21: #{tpu_custom_call.1} parent=11 // pred_check
          %p210 = pneg %p119
        $region22: #{tpu_custom_call.1} parent=11 // pred_check_branch
          %212 = sbr.rel (%p210) target = $region24
        $region23: #{tpu_custom_call.1} parent=11 // pred_region
          _
        $region24: #{tpu_custom_call.1} parent=11 // pred_fallthru
          _
        // Predicated region
        $region25: #{tpu_custom_call.1} parent=11 // pred_check
          %p213 = pneg %p140
        $region26: #{tpu_custom_call.1} parent=11 // pred_check_branch
          %215 = sbr.rel (%p213) target = $region28
        $region27: #{tpu_custom_call.1} parent=11 // pred_region
          _
        $region28: #{tpu_custom_call.1} parent=11 // pred_fallthru
          _
        // Predicated region
        $region29: #{tpu_custom_call.1} parent=11 // pred_check
          %p216 = pneg %p161
        $region30: #{tpu_custom_call.1} parent=11 // pred_check_branch
          %218 = sbr.rel (%p216) target = $region32
        $region31: #{tpu_custom_call.1} parent=11 // pred_region
          _
        $region32: #{tpu_custom_call.1} parent=11 // pred_fallthru
          _
      $region12: #{tpu_custom_call.1} parent=5 // pred_fallthru
        _
      %p219 = scmp.lt.s32.totalorder %s18, 4
      // Predicated region
      $region33: #{tpu_custom_call.1} parent=5 // pred_check
        %p220 = pneg %p219
      $region34: #{tpu_custom_call.1} parent=5 // pred_check_branch
        %222 = sbr.rel (%p220) target = $region36
      $region35: #{tpu_custom_call.1} parent=5 // pred_region
        // Predicated region
        $region37: #{tpu_custom_call.1} parent=35 // pred_check
          %p223 = pneg %p50
        $region38: #{tpu_custom_call.1} parent=35 // pred_check_branch
          %225 = sbr.rel (%p223) target = $region40
        $region39: #{tpu_custom_call.1} parent=35 // pred_region
          %s226 = sand.u32 %s40, 1
          %s227 = scalar_lea.sflag [#allocation6], %s226
          %s228 = sand.u32 %s40, 1
          %s229 = smul.addr %s228, 80
          %s230 = scalar_lea.vmem [#allocation5], %s229
          %s232 = ssub.s32 1280, 1280
          %233 = vsyncadd %s227, %s232
          %s234 = smul.addr %s25, 10
          %s235 = smul.addr %s234, 128
          %s236 = scalar_lea.hbm %s0, %s235
          %s237 = sshll.u32 %s230, 4
          %s238 = int_to_ptr.vmem [resolvable:$true] %s237
          %243 = dma.hbm_to_vmem [thread:$0]  %s236, 1280, %s238, %s227, 128, 128, 8
        $region40: #{tpu_custom_call.1} parent=35 // pred_fallthru
          _
      $region36: #{tpu_custom_call.1} parent=5 // pred_fallthru
        _
      %p244 = scmp.le.s32.totalorder 1, %s18
      %p245 = scmp.lt.s32.totalorder %s18, 5
      %p246 = pnand %p244, %p245
      %p247 = pneg %p246
      // Predicated region
      $region41: #{tpu_custom_call.1} parent=5 // pred_check
        _
      $region42: #{tpu_custom_call.1} parent=5 // pred_check_branch
        %249 = sbr.rel (%p246) target = $region44
      $region43: #{tpu_custom_call.1} parent=5 // pred_region
        %s250 = ssub.s32 %s18, 1
        %s251 = sand.u32 %s43, 1
        %s252 = scalar_lea.sflag [#allocation6], %s251
        %s253 = sand.u32 %s43, 1
        %s254 = smul.addr %s253, 80
        %s255 = scalar_lea.vmem [#allocation5], %s254
        // Predicated region
        $region45: #{tpu_custom_call.1} parent=43 // pred_check
          %p256 = pneg %p56
        $region46: #{tpu_custom_call.1} parent=43 // pred_check_branch
          %258 = sbr.rel (%p256) target = $region48
        $region47: #{tpu_custom_call.1} parent=43 // pred_region
          %259 = dma.done %s252, 1280
        $region48: #{tpu_custom_call.1} parent=43 // pred_fallthru
          _
        %s260 = sand.u32 %s43, 1
        %s261 = scalar_lea.sflag [#allocation6], %s260
        %s262 = sand.u32 %s43, 1
        %s263 = smul.addr %s262, 80
        %s264 = scalar_lea.vmem [#allocation5], %s263
        %p265 = pneg %p56
        %p266 = pneg %p53
        %p267 = pneg %p77
        %p268 = pneg %p74
        %p269 = pneg %p98
        %p270 = pneg %p95
        %p271 = pneg %p119
        %p272 = pneg %p116
        %p273 = pneg %p140
        %p274 = pneg %p137
        %p275 = pneg %p161
        %p276 = pneg %p158
        %p277 = pneg %p189
        %p278 = pneg %p186
        %s279 = sand.u32 %s176, 1
        %s280 = scalar_lea.sflag [#allocation7], %s279
        %s281 = sand.u32 %s176, 1
        %s282 = smul.addr %s281, 2
        %s283 = scalar_lea.vmem [#allocation8], %s282
        %s285 = smul.u32 %s28, 8
        %286 = vst [vmem:[#allocation2] sm:$0xff] 0.0
        %287 = vst [vmem:[#allocation2 + $0x8] sm:$0xff] 0.0
        %vm288 = vcmask 785408
        %289 = vst.msk [vmem:[#allocation2 + $0x10] sm:$0xff] %vm288, 0.0
        %s290 = ssub.s32 %s285, 2
        %p291 = scmp.ge.s32.totalorder %s290, 0
        %p292 = scmp.lt.s32.totalorder %s290, 16
        %p293 = pnand %p291, %p292
        %p294 = pneg %p293
        %s295 = scalar_select %p294, 1, 0
        %s296 = scvt.s32.f32 %s295
        %p297 = scmp.gt.s32.totalorder %s290, 0
        %s298 = scalar_select %p297, %s290, 0
        %p299 = scmp.lt.s32.totalorder %s298, 15
        %s300 = scalar_select %p299, %s298, 15
        %s301 = scalar_lea.vmem %s255, %s300 [#allocation5]
        %v302 = vld [vmem:[%s301] sm:$0x1]
        %v303 = vld [vmem:[%s301 + $0x10] sm:$0x1]
        %v304 = vld [vmem:[%s301 + $0x20] sm:$0x1]
        %v305 = vld [vmem:[%s301 + $0x30] sm:$0x1]
        %v306 = vld [vmem:[%s301 + $0x40] sm:$0x1]
        %v307 = vstv %s296
        %v308 = vmul.f32 %v302, %v307
        %v309 = vmul.f32 %v303, %v307
        %v310 = vmul.f32 %v304, %v307
        %v311 = vmul.f32 %v305, %v307
        %v312 = vmul.f32 %v306, %v307
        %v318 = vrot.slane %v309, 7
        %vm319 = vcmask 1041409
        %v320 = vsel %vm319, %v318, %v308
        %v321 = vrot.slane %v310, 6
        %vm322 = vcmask 1042434
        %v323 = vsel %vm322, %v321, %v320
        %v324 = vrot.slane %v311, 5
        %vm325 = vcmask 1043459
        %v326 = vsel %vm325, %v324, %v323
        %v327 = vrot.slane %v312, 4
        %vm328 = vcmask 1044484
        %v329 = vsel %vm328, %v327, %v326
        %330 = vrot.lane.b32.xlu0 %v329, 1
        %v331 = vpop.permute.xlu0 %330
        %vm333 = vcmask 135176
        %334 = vst.msk [vmem:[#allocation2 + $0x8] sm:$0x1f] %vm333, %v331
        %s335 = sadd.s32 %s285, 4294967295
        %p336 = scmp.ge.s32.totalorder %s335, 0
        %p337 = scmp.lt.s32.totalorder %s335, 16
        %p338 = pnand %p336, %p337
        %p339 = pneg %p338
        %s340 = scalar_select %p339, 1, 0
        %s341 = scvt.s32.f32 %s340
        %p342 = scmp.gt.s32.totalorder %s335, 0
        %s343 = scalar_select %p342, %s335, 0
        %p344 = scmp.lt.s32.totalorder %s343, 15
        %s345 = scalar_select %p344, %s343, 15
        %s346 = scalar_lea.vmem %s255, %s345 [#allocation5]
        %v347 = vld [vmem:[%s346] sm:$0x1]
        %v348 = vld [vmem:[%s346 + $0x10] sm:$0x1]
        %v349 = vld [vmem:[%s346 + $0x20] sm:$0x1]
        %v350 = vld [vmem:[%s346 + $0x30] sm:$0x1]
        %v351 = vld [vmem:[%s346 + $0x40] sm:$0x1]
        %v352 = vstv %s341
        %v353 = vmul.f32 %v347, %v352
        %v354 = vmul.f32 %v348, %v352
        %v355 = vmul.f32 %v349, %v352
        %v356 = vmul.f32 %v350, %v352
        %v357 = vmul.f32 %v351, %v352
        %v363 = vrot.slane %v354, 7
        %v364 = vsel %vm319, %v363, %v353
        %v365 = vrot.slane %v355, 6
        %v366 = vsel %vm322, %v365, %v364
        %v367 = vrot.slane %v356, 5
        %v368 = vsel %vm325, %v367, %v366
        %v369 = vrot.slane %v357, 4
        %v370 = vsel %vm328, %v369, %v368
        %371 = vrot.lane.b32.xlu0 %v370, 19
        %v372 = vpop.permute.xlu0 %371
        %vm374 = vcmask 282776
        %375 = vst.msk [vmem:[#allocation2 + $0x8] sm:$0x1f] %vm374, %v372
        %p376 = scmp.ge.s32.totalorder %s285, 0
        %p377 = scmp.lt.s32.totalorder %s285, 16
        %p378 = pnand %p376, %p377
        %p379 = pneg %p378
        %s380 = scalar_select %p379, 1, 0
        %s381 = scvt.s32.f32 %s380
        %p382 = scmp.gt.s32.totalorder %s285, 0
        %s383 = scalar_select %p382, %s285, 0
        %p384 = scmp.lt.s32.totalorder %s383, 15
        %s385 = scalar_select %p384, %s383, 15
        %s386 = scalar_lea.vmem %s255, %s385 [#allocation5]
        %v387 = vld [vmem:[%s386] sm:$0x1]
        %v388 = vld [vmem:[%s386 + $0x10] sm:$0x1]
        %v389 = vld [vmem:[%s386 + $0x20] sm:$0x1]
        %v390 = vld [vmem:[%s386 + $0x30] sm:$0x1]
        %v391 = vld [vmem:[%s386 + $0x40] sm:$0x1]
        %v392 = vstv %s381
        %v393 = vmul.f32 %v387, %v392
        %v394 = vmul.f32 %v388, %v392
        %v395 = vmul.f32 %v389, %v392
        %v396 = vmul.f32 %v390, %v392
        %v397 = vmul.f32 %v391, %v392
        %v403 = vrot.slane %v394, 7
        %v404 = vsel %vm319, %v403, %v393
        %v405 = vrot.slane %v395, 6
        %v406 = vsel %vm322, %v405, %v404
        %v407 = vrot.slane %v396, 5
        %v408 = vsel %vm325, %v407, %v406
        %v409 = vrot.slane %v397, 4
        %v410 = vsel %vm328, %v409, %v408
        %411 = vrot.lane.b32.xlu0 %v410, 37
        %v412 = vpop.permute.xlu0 %411
        %vm414 = vcmask 430376
        %415 = vst.msk [vmem:[#allocation2 + $0x8] sm:$0x1f] %vm414, %v412
        %s416 = sadd.s32 %s285, 1
        %p417 = scmp.ge.s32.totalorder %s416, 0
        %p418 = scmp.lt.s32.totalorder %s416, 16
        %p419 = pnand %p417, %p418
        %p420 = pneg %p419
        %s421 = scalar_select %p420, 1, 0
        %s422 = scvt.s32.f32 %s421
        %p423 = scmp.gt.s32.totalorder %s416, 0
        %s424 = scalar_select %p423, %s416, 0
        %p425 = scmp.lt.s32.totalorder %s424, 15
        %s426 = scalar_select %p425, %s424, 15
        %s427 = scalar_lea.vmem %s255, %s426 [#allocation5]
        %v428 = vld [vmem:[%s427] sm:$0x1]
        %v429 = vld [vmem:[%s427 + $0x10] sm:$0x1]
        %v430 = vld [vmem:[%s427 + $0x20] sm:$0x1]
        %v431 = vld [vmem:[%s427 + $0x30] sm:$0x1]
        %v432 = vld [vmem:[%s427 + $0x40] sm:$0x1]
        %v433 = vstv %s422
        %v434 = vmul.f32 %v428, %v433
        %v435 = vmul.f32 %v429, %v433
        %v436 = vmul.f32 %v430, %v433
        %v437 = vmul.f32 %v431, %v433
        %v438 = vmul.f32 %v432, %v433
        %v444 = vrot.slane %v435, 7
        %v445 = vsel %vm319, %v444, %v434
        %v446 = vrot.slane %v436, 6
        %v447 = vsel %vm322, %v446, %v445
        %v448 = vrot.slane %v437, 5
        %v449 = vsel %vm325, %v448, %v447
        %v450 = vrot.slane %v438, 4
        %v451 = vsel %vm328, %v450, %v449
        %452 = vrot.lane.b32.xlu0 %v451, 55
        %v453 = vpop.permute.xlu0 %452
        %vm455 = vcmask 577976
        %456 = vst.msk [vmem:[#allocation2 + $0x8] sm:$0x1f] %vm455, %v453
        %s457 = sadd.s32 %s285, 2
        %p458 = scmp.ge.s32.totalorder %s457, 0
        %p459 = scmp.lt.s32.totalorder %s457, 16
        %p460 = pnand %p458, %p459
        %p461 = pneg %p460
        %s462 = scalar_select %p461, 1, 0
        %s463 = scvt.s32.f32 %s462
        %p464 = scmp.gt.s32.totalorder %s457, 0
        %s465 = scalar_select %p464, %s457, 0
        %p466 = scmp.lt.s32.totalorder %s465, 15
        %s467 = scalar_select %p466, %s465, 15
        %s468 = scalar_lea.vmem %s255, %s467 [#allocation5]
        %v469 = vld [vmem:[%s468] sm:$0x1]
        %v470 = vld [vmem:[%s468 + $0x10] sm:$0x1]
        %v471 = vld [vmem:[%s468 + $0x20] sm:$0x1]
        %v472 = vld [vmem:[%s468 + $0x30] sm:$0x1]
        %v473 = vld [vmem:[%s468 + $0x40] sm:$0x1]
        %v474 = vstv %s463
        %v475 = vmul.f32 %v469, %v474
        %v476 = vmul.f32 %v470, %v474
        %v477 = vmul.f32 %v471, %v474
        %v478 = vmul.f32 %v472, %v474
        %v479 = vmul.f32 %v473, %v474
        %v485 = vrot.slane %v476, 7
        %v486 = vsel %vm319, %v485, %v475
        %v487 = vrot.slane %v477, 6
        %v488 = vsel %vm322, %v487, %v486
        %v489 = vrot.slane %v478, 5
        %v490 = vsel %vm325, %v489, %v488
        %v491 = vrot.slane %v479, 4
        %v492 = vsel %vm328, %v491, %v490
        %493 = vrot.lane.b32.xlu0 %v492, 73
        %v494 = vpop.permute.xlu0 %493
        %vm496 = vcmask 725576
        %497 = vst.msk [vmem:[#allocation2 + $0x8] sm:$0x1f] %vm496, %v494
        %s498 = sadd.s32 %s285, 3
        %p499 = scmp.ge.s32.totalorder %s498, 0
        %p500 = scmp.lt.s32.totalorder %s498, 16
        %p501 = pnand %p499, %p500
        %p502 = pneg %p501
        %s503 = scalar_select %p502, 1, 0
        %s504 = scvt.s32.f32 %s503
        %p505 = scmp.gt.s32.totalorder %s498, 0
        %s506 = scalar_select %p505, %s498, 0
        %p507 = scmp.lt.s32.totalorder %s506, 15
        %s508 = scalar_select %p507, %s506, 15
        %s509 = scalar_lea.vmem %s255, %s508 [#allocation5]
        %v510 = vld [vmem:[%s509] sm:$0x1]
        %v511 = vld [vmem:[%s509 + $0x10] sm:$0x1]
        %v512 = vld [vmem:[%s509 + $0x20] sm:$0x1]
        %v513 = vld [vmem:[%s509 + $0x30] sm:$0x1]
        %v514 = vld [vmem:[%s509 + $0x40] sm:$0x1]
        %v515 = vstv %s504
        %v516 = vmul.f32 %v510, %v515
        %v517 = vmul.f32 %v511, %v515
        %v518 = vmul.f32 %v512, %v515
        %v519 = vmul.f32 %v513, %v515
        %v520 = vmul.f32 %v514, %v515
        %v526 = vrot.slane %v517, 7
        %v527 = vsel %vm319, %v526, %v516
        %v528 = vrot.slane %v518, 6
        %v529 = vsel %vm322, %v528, %v527
        %v530 = vrot.slane %v519, 5
        %v531 = vsel %vm325, %v530, %v529
        %v532 = vrot.slane %v520, 4
        %v533 = vsel %vm328, %v532, %v531
        %534 = vrot.lane.b32.xlu0 %v533, 91
        %v535 = vpop.permute.xlu0 %534
        %vm537 = vcmask 873176
        %538 = vst.msk [vmem:[#allocation2 + $0x8] sm:$0x1f] %vm537, %v535
        %s539 = sadd.s32 %s285, 4
        %p540 = scmp.ge.s32.totalorder %s539, 0
        %p541 = scmp.lt.s32.totalorder %s539, 16
        %p542 = pnand %p540, %p541
        %p543 = pneg %p542
        %s544 = scalar_select %p543, 1, 0
        %s545 = scvt.s32.f32 %s544
        %p546 = scmp.gt.s32.totalorder %s539, 0
        %s547 = scalar_select %p546, %s539, 0
        %p548 = scmp.lt.s32.totalorder %s547, 15
        %s549 = scalar_select %p548, %s547, 15
        %s550 = scalar_lea.vmem %s255, %s549 [#allocation5]
        %v551 = vld [vmem:[%s550] sm:$0x1]
        %v552 = vld [vmem:[%s550 + $0x10] sm:$0x1]
        %v553 = vld [vmem:[%s550 + $0x20] sm:$0x1]
        %v554 = vld [vmem:[%s550 + $0x30] sm:$0x1]
        %v555 = vld [vmem:[%s550 + $0x40] sm:$0x1]
        %v556 = vstv %s545
        %v557 = vmul.f32 %v551, %v556
        %v558 = vmul.f32 %v552, %v556
        %v559 = vmul.f32 %v553, %v556
        %v560 = vmul.f32 %v554, %v556
        %v561 = vmul.f32 %v555, %v556
        %v567 = vrot.slane %v558, 7
        %v568 = vsel %vm319, %v567, %v557
        %v569 = vrot.slane %v559, 6
        %v570 = vsel %vm322, %v569, %v568
        %v571 = vrot.slane %v560, 5
        %v572 = vsel %vm325, %v571, %v570
        %v573 = vrot.slane %v561, 4
        %v574 = vsel %vm328, %v573, %v572
        %575 = vrot.lane.b32.xlu0 %v574, 109
        %v576 = vpop.permute.xlu0 %575
        %vm578 = vcmask 1020776
        %579 = vst.msk [vmem:[#allocation2 + $0x8] sm:$0x1f] %vm578, %v576
        %s580 = sadd.s32 %s285, 5
        %p581 = scmp.ge.s32.totalorder %s580, 0
        %p582 = scmp.lt.s32.totalorder %s580, 16
        %p583 = pnand %p581, %p582
        %p584 = pneg %p583
        %s585 = scalar_select %p584, 1, 0
        %s586 = scvt.s32.f32 %s585
        %p587 = scmp.gt.s32.totalorder %s580, 0
        %s588 = scalar_select %p587, %s580, 0
        %p589 = scmp.lt.s32.totalorder %s588, 15
        %s590 = scalar_select %p589, %s588, 15
        %s591 = scalar_lea.vmem %s255, %s590 [#allocation5]
        %v592 = vld [vmem:[%s591] sm:$0x1]
        %v593 = vld [vmem:[%s591 + $0x10] sm:$0x1]
        %v594 = vld [vmem:[%s591 + $0x20] sm:$0x1]
        %v595 = vld [vmem:[%s591 + $0x30] sm:$0x1]
        %v596 = vld [vmem:[%s591 + $0x40] sm:$0x1]
        %v597 = vstv %s586
        %v598 = vmul.f32 %v592, %v597
        %v599 = vmul.f32 %v593, %v597
        %v600 = vmul.f32 %v594, %v597
        %v601 = vmul.f32 %v595, %v597
        %v602 = vmul.f32 %v596, %v597
        %v608 = vrot.slane %v599, 7
        %v609 = vsel %vm319, %v608, %v598
        %v610 = vrot.slane %v600, 6
        %v611 = vsel %vm322, %v610, %v609
        %v612 = vrot.slane %v601, 5
        %v613 = vsel %vm325, %v612, %v611
        %v614 = vrot.slane %v602, 4
        %v615 = vsel %vm328, %v614, %v613
        %616 = vrot.lane.b32.xlu0 %v615, 127
        %v617 = vpop.permute.xlu0 %616
        %vm619 = vcmask 1045496
        %620 = vst.msk [vmem:[#allocation2 + $0x8] sm:$0x1f] %vm619, %v617
        %vm621 = vcmask 118784
        %622 = vst.msk [vmem:[#allocation2 + $0x10] sm:$0x1f] %vm621, %v617
        %s623 = sadd.s32 %s285, 6
        %p624 = scmp.ge.s32.totalorder %s623, 0
        %p625 = scmp.lt.s32.totalorder %s623, 16
        %p626 = pnand %p624, %p625
        %p627 = pneg %p626
        %s628 = scalar_select %p627, 1, 0
        %s629 = scvt.s32.f32 %s628
        %p630 = scmp.gt.s32.totalorder %s623, 0
        %s631 = scalar_select %p630, %s623, 0
        %p632 = scmp.lt.s32.totalorder %s631, 15
        %s633 = scalar_select %p632, %s631, 15
        %s634 = scalar_lea.vmem %s255, %s633 [#allocation5]
        %v635 = vld [vmem:[%s634] sm:$0x1]
        %v636 = vld [vmem:[%s634 + $0x10] sm:$0x1]
        %v637 = vld [vmem:[%s634 + $0x20] sm:$0x1]
        %v638 = vld [vmem:[%s634 + $0x30] sm:$0x1]
        %v639 = vld [vmem:[%s634 + $0x40] sm:$0x1]
        %v640 = vstv %s629
        %v641 = vmul.f32 %v635, %v640
        %v642 = vmul.f32 %v636, %v640
        %v643 = vmul.f32 %v637, %v640
        %v644 = vmul.f32 %v638, %v640
        %v645 = vmul.f32 %v639, %v640
        %v651 = vrot.slane %v642, 7
        %v652 = vsel %vm319, %v651, %v641
        %v653 = vrot.slane %v643, 6
        %v654 = vsel %vm322, %v653, %v652
        %v655 = vrot.slane %v644, 5
        %v656 = vsel %vm325, %v655, %v654
        %v657 = vrot.slane %v645, 4
        %v658 = vsel %vm328, %v657, %v656
        %659 = vrot.lane.b32.xlu0 %v658, 17
        %v660 = vpop.permute.xlu0 %659
        %vm662 = vcmask 266376
        %663 = vst.msk [vmem:[#allocation2 + $0x10] sm:$0x1f] %vm662, %v660
        %s664 = sadd.s32 %s285, 7
        %p665 = scmp.ge.s32.totalorder %s664, 0
        %p666 = scmp.lt.s32.totalorder %s664, 16
        %p667 = pnand %p665, %p666
        %p668 = pneg %p667
        %s669 = scalar_select %p668, 1, 0
        %s670 = scvt.s32.f32 %s669
        %p671 = scmp.gt.s32.totalorder %s664, 0
        %s672 = scalar_select %p671, %s664, 0
        %p673 = scmp.lt.s32.totalorder %s672, 15
        %s674 = scalar_select %p673, %s672, 15
        %s675 = scalar_lea.vmem %s255, %s674 [#allocation5]
        %v676 = vld [vmem:[%s675] sm:$0x1]
        %v677 = vld [vmem:[%s675 + $0x10] sm:$0x1]
        %v678 = vld [vmem:[%s675 + $0x20] sm:$0x1]
        %v679 = vld [vmem:[%s675 + $0x30] sm:$0x1]
        %v680 = vld [vmem:[%s675 + $0x40] sm:$0x1]
        %v681 = vstv %s670
        %v682 = vmul.f32 %v676, %v681
        %v683 = vmul.f32 %v677, %v681
        %v684 = vmul.f32 %v678, %v681
        %v685 = vmul.f32 %v679, %v681
        %v686 = vmul.f32 %v680, %v681
        %v692 = vrot.slane %v683, 7
        %v693 = vsel %vm319, %v692, %v682
        %v694 = vrot.slane %v684, 6
        %v695 = vsel %vm322, %v694, %v693
        %v696 = vrot.slane %v685, 5
        %v697 = vsel %vm325, %v696, %v695
        %v698 = vrot.slane %v686, 4
        %v699 = vsel %vm328, %v698, %v697
        %700 = vrot.lane.b32.xlu0 %v699, 35
        %v701 = vpop.permute.xlu0 %700
        %vm703 = vcmask 413976
        %704 = vst.msk [vmem:[#allocation2 + $0x10] sm:$0x1f] %vm703, %v701
        %s705 = sadd.s32 %s285, 8
        %p706 = scmp.ge.s32.totalorder %s705, 0
        %p707 = scmp.lt.s32.totalorder %s705, 16
        %p708 = pnand %p706, %p707
        %p709 = pneg %p708
        %s710 = scalar_select %p709, 1, 0
        %s711 = scvt.s32.f32 %s710
        %p712 = scmp.gt.s32.totalorder %s705, 0
        %s713 = scalar_select %p712, %s705, 0
        %p714 = scmp.lt.s32.totalorder %s713, 15
        %s715 = scalar_select %p714, %s713, 15
        %s716 = scalar_lea.vmem %s255, %s715 [#allocation5]
        %v717 = vld [vmem:[%s716] sm:$0x1]
        %v718 = vld [vmem:[%s716 + $0x10] sm:$0x1]
        %v719 = vld [vmem:[%s716 + $0x20] sm:$0x1]
        %v720 = vld [vmem:[%s716 + $0x30] sm:$0x1]
        %v721 = vld [vmem:[%s716 + $0x40] sm:$0x1]
        %v722 = vstv %s711
        %v723 = vmul.f32 %v717, %v722
        %v724 = vmul.f32 %v718, %v722
        %v725 = vmul.f32 %v719, %v722
        %v726 = vmul.f32 %v720, %v722
        %v727 = vmul.f32 %v721, %v722
        %v733 = vrot.slane %v724, 7
        %v734 = vsel %vm319, %v733, %v723
        %v735 = vrot.slane %v725, 6
        %v736 = vsel %vm322, %v735, %v734
        %v737 = vrot.slane %v726, 5
        %v738 = vsel %vm325, %v737, %v736
        %v739 = vrot.slane %v727, 4
        %v740 = vsel %vm328, %v739, %v738
        %741 = vrot.lane.b32.xlu0 %v740, 53
        %v742 = vpop.permute.xlu0 %741
        %vm744 = vcmask 561576
        %745 = vst.msk [vmem:[#allocation2 + $0x10] sm:$0x1f] %vm744, %v742
        %s746 = sadd.s32 %s285, 9
        %p747 = scmp.ge.s32.totalorder %s746, 0
        %p748 = scmp.lt.s32.totalorder %s746, 16
        %p749 = pnand %p747, %p748
        %p750 = pneg %p749
        %s751 = scalar_select %p750, 1, 0
        %s752 = scvt.s32.f32 %s751
        %p753 = scmp.gt.s32.totalorder %s746, 0
        %s754 = scalar_select %p753, %s746, 0
        %p755 = scmp.lt.s32.totalorder %s754, 15
        %s756 = scalar_select %p755, %s754, 15
        %s757 = scalar_lea.vmem %s255, %s756 [#allocation5]
        %v758 = vld [vmem:[%s757] sm:$0x1]
        %v759 = vld [vmem:[%s757 + $0x10] sm:$0x1]
        %v760 = vld [vmem:[%s757 + $0x20] sm:$0x1]
        %v761 = vld [vmem:[%s757 + $0x30] sm:$0x1]
        %v762 = vld [vmem:[%s757 + $0x40] sm:$0x1]
        %v763 = vstv %s752
        %v764 = vmul.f32 %v758, %v763
        %v765 = vmul.f32 %v759, %v763
        %v766 = vmul.f32 %v760, %v763
        %v767 = vmul.f32 %v761, %v763
        %v768 = vmul.f32 %v762, %v763
        %v774 = vrot.slane %v765, 7
        %v775 = vsel %vm319, %v774, %v764
        %v776 = vrot.slane %v766, 6
        %v777 = vsel %vm322, %v776, %v775
        %v778 = vrot.slane %v767, 5
        %v779 = vsel %vm325, %v778, %v777
        %v780 = vrot.slane %v768, 4
        %v781 = vsel %vm328, %v780, %v779
        %782 = vrot.lane.b32.xlu0 %v781, 71
        %v783 = vpop.permute.xlu0 %782
        %vm785 = vcmask 709176
        %786 = vst.msk [vmem:[#allocation2 + $0x10] sm:$0x1f] %vm785, %v783
        %v787 = vld [vmem:[#allocation2] sm:$0xff]
        %v788 = vld [vmem:[#allocation2 + $0x8] sm:$0xff]
        %v789 = vld [vmem:[#allocation2 + $0x10] sm:$0xff]
        %793 = vrot.lane.b32.xlu0 %v787, 1
        %v794 = vpop.permute.xlu0 %793
        %795 = vrot.lane.b32.xlu0 %v788, 1
        %v796 = vpop.permute.xlu0 %795
        %797 = vrot.lane.b32.xlu0 %v789, 1
        %v798 = vpop.permute.xlu0 %797
        %vm799 = vcmask 7168
        %v800 = vsel %vm799, %v794, %v796
        %v801 = vsel %vm799, %v796, %v798
        %804 = vst [vmem:[#allocation3] sm:$0xff] %v800
        %vm805 = vcmask 424960
        %806 = vst.msk [vmem:[#allocation3 + $0x8] sm:$0xff] %vm805, %v801
        %v807 = vld [vmem:[#allocation2 + $0x8] sm:$0xff]
        %v808 = vld [vmem:[#allocation2 + $0x10] sm:$0xff]
        %809 = vst [vmem:[#allocation3 + $0x10] sm:$0xff] %v807
        %810 = vst.msk [vmem:[#allocation3 + $0x18] sm:$0xff] %vm805, %v808
        %v811 = vld [vmem:[#allocation2 + $0x8] sm:$0xff]
        %v812 = vld [vmem:[#allocation2 + $0x10] sm:$0xff]
        %815 = vrot.lane.b32.xlu0 %v811, 127
        %v816 = vpop.permute.xlu0 %815
        %817 = vrot.lane.b32.xlu0 %v812, 127
        %v818 = vpop.permute.xlu0 %817
        %vm819 = vcmask 1039360
        %v820 = vsel %vm819, %v816, %v818
        %823 = vst [vmem:[#allocation3 + $0x20] sm:$0xff] %v820
        %824 = vst.msk [vmem:[#allocation3 + $0x28] sm:$0xff] %vm805, %v818
        %v825 = vld [vmem:[#allocation2 + $0x8] sm:$0xff]
        %v826 = vld [vmem:[#allocation2 + $0x10] sm:$0xff]
        %829 = vrot.lane.b32.xlu0 %v825, 111
        %v830 = vpop.permute.xlu0 %829
        %831 = vrot.lane.b32.xlu0 %v826, 111
        %v832 = vpop.permute.xlu0 %831
        %vm833 = vcmask 908288
        %v834 = vsel %vm833, %v830, %v832
        %837 = vst [vmem:[#allocation3 + $0x30] sm:$0xff] %v834
        %838 = vst.msk [vmem:[#allocation3 + $0x38] sm:$0xff] %vm805, %v832
        %v839 = vld [vmem:[#allocation2 + $0x8] sm:$0xff]
        %v840 = vld [vmem:[#allocation2 + $0x10] sm:$0xff]
        %843 = vrot.lane.b32.xlu0 %v839, 110
        %v844 = vpop.permute.xlu0 %843
        %845 = vrot.lane.b32.xlu0 %v840, 110
        %v846 = vpop.permute.xlu0 %845
        %vm847 = vcmask 900096
        %v848 = vsel %vm847, %v844, %v846
        %851 = vst [vmem:[#allocation3 + $0x40] sm:$0xff] %v848
        %852 = vst.msk [vmem:[#allocation3 + $0x48] sm:$0xff] %vm805, %v846
        %v853 = vld [vmem:[#allocation2 + $0x8] sm:$0xff]
        %v854 = vld [vmem:[#allocation2 + $0x10] sm:$0xff]
        %857 = vrot.lane.b32.xlu0 %v853, 109
        %v858 = vpop.permute.xlu0 %857
        %859 = vrot.lane.b32.xlu0 %v854, 109
        %v860 = vpop.permute.xlu0 %859
        %vm861 = vcmask 891904
        %v862 = vsel %vm861, %v858, %v860
        %865 = vst [vmem:[#allocation3 + $0x50] sm:$0xff] %v862
        %866 = vst.msk [vmem:[#allocation3 + $0x58] sm:$0xff] %vm805, %v860
        %v867 = vld [vmem:[#allocation2 + $0x8] sm:$0xff]
        %v868 = vld [vmem:[#allocation2 + $0x10] sm:$0xff]
        %871 = vrot.lane.b32.xlu0 %v867, 93
        %v872 = vpop.permute.xlu0 %871
        %873 = vrot.lane.b32.xlu0 %v868, 93
        %v874 = vpop.permute.xlu0 %873
        %vm875 = vcmask 760832
        %v876 = vsel %vm875, %v872, %v874
        %879 = vst [vmem:[#allocation3 + $0x60] sm:$0xff] %v876
        %880 = vst.msk [vmem:[#allocation3 + $0x68] sm:$0xff] %vm805, %v874
        %v881 = vld [vmem:[#allocation2 + $0x8] sm:$0xff]
        %v882 = vld [vmem:[#allocation2 + $0x10] sm:$0xff]
        %885 = vrot.lane.b32.xlu0 %v881, 92
        %v886 = vpop.permute.xlu0 %885
        %887 = vrot.lane.b32.xlu0 %v882, 92
        %v888 = vpop.permute.xlu0 %887
        %vm889 = vcmask 752640
        %v890 = vsel %vm889, %v886, %v888
        %893 = vst [vmem:[#allocation3 + $0x70] sm:$0xff] %v890
        %894 = vst.msk [vmem:[#allocation3 + $0x78] sm:$0xff] %vm805, %v888
        %v895 = vld [vmem:[#allocation2 + $0x8] sm:$0xff]
        %v896 = vld [vmem:[#allocation2 + $0x10] sm:$0xff]
        %899 = vrot.lane.b32.xlu0 %v895, 91
        %v900 = vpop.permute.xlu0 %899
        %901 = vrot.lane.b32.xlu0 %v896, 91
        %v902 = vpop.permute.xlu0 %901
        %vm903 = vcmask 744448
        %v904 = vsel %vm903, %v900, %v902
        %907 = vst [vmem:[#allocation3 + $0x80] sm:$0xff] %v904
        %908 = vst.msk [vmem:[#allocation3 + $0x88] sm:$0xff] %vm805, %v902
        %v909 = vld [vmem:[%s1] sm:$0xff]
        %v910 = vld [vmem:[%s1 + $0x8] sm:$0xff]
        %v911 = vld [vmem:[%s1 + $0x10] sm:$0xff]
        %v912 = vld [vmem:[%s1 + $0x18] sm:$0xff]
        %v913 = vld [vmem:[%s1 + $0x20] sm:$0xff]
        %v914 = vld [vmem:[%s1 + $0x28] sm:$0xff]
        %v915 = vld [vmem:[%s1 + $0x30] sm:$0xff]
        %v916 = vld [vmem:[%s1 + $0x38] sm:$0xff]
        %v917 = vld [vmem:[#allocation3] sm:$0xff]
        %v918 = vld [vmem:[#allocation3 + $0x8] sm:$0xff]
        %v919 = vld [vmem:[#allocation3 + $0x10] sm:$0xff]
        %v920 = vld [vmem:[#allocation3 + $0x18] sm:$0xff]
        %v921 = vld [vmem:[#allocation3 + $0x20] sm:$0xff]
        %v922 = vld [vmem:[#allocation3 + $0x28] sm:$0xff]
        %v923 = vld [vmem:[#allocation3 + $0x30] sm:$0xff]
        %v924 = vld [vmem:[#allocation3 + $0x38] sm:$0xff]
        %v925 = vld [vmem:[#allocation3 + $0x40] sm:$0xff]
        %v926 = vld [vmem:[#allocation3 + $0x48] sm:$0xff]
        %v927 = vld [vmem:[#allocation3 + $0x50] sm:$0xff]
        %v928 = vld [vmem:[#allocation3 + $0x58] sm:$0xff]
        %v929 = vld [vmem:[#allocation3 + $0x60] sm:$0xff]
        %v930 = vld [vmem:[#allocation3 + $0x68] sm:$0xff]
        %v931 = vld [vmem:[#allocation3 + $0x70] sm:$0xff]
        %v932 = vld [vmem:[#allocation3 + $0x78] sm:$0xff]
        %v933 = vld [vmem:[#allocation3 + $0x80] sm:$0xff]
        %v934 = vld [vmem:[#allocation3 + $0x88] sm:$0xff]
        %v935 = vld [vmem:[%s2] sm:$0xff]
        %v936 = vld [vmem:[%s2 + $0x8] sm:$0xff]
        %v937 = vld [vmem:[%s2 + $0x10] sm:$0xff]
        %v938 = vld [vmem:[%s2 + $0x18] sm:$0xff]
        %v939 = vld [vmem:[%s2 + $0x20] sm:$0xff]
        %v940 = vld [vmem:[%s2 + $0x28] sm:$0xff]
        %v941 = vld [vmem:[%s2 + $0x30] sm:$0xff]
        %v942 = vld [vmem:[%s2 + $0x38] sm:$0xff]
        %944 = vset.pattern.permute.xlu0 0
        %945 = vperm.xlu0 %944, %v935
        %v946 = vpop.permute.xlu0 %945
        %949 = vset.pattern.permute.xlu0 0
        %950 = vperm.xlu0 %949, %v936
        %v951 = vpop.permute.xlu0 %950
        %954 = vset.pattern.permute.xlu0 0
        %955 = vperm.xlu0 %954, %v937
        %v956 = vpop.permute.xlu0 %955
        %959 = vset.pattern.permute.xlu0 0
        %960 = vperm.xlu0 %959, %v938
        %v961 = vpop.permute.xlu0 %960
        %964 = vset.pattern.permute.xlu0 0
        %965 = vperm.xlu0 %964, %v939
        %v966 = vpop.permute.xlu0 %965
        %969 = vset.pattern.permute.xlu0 0
        %970 = vperm.xlu0 %969, %v940
        %v971 = vpop.permute.xlu0 %970
        %974 = vset.pattern.permute.xlu0 0
        %975 = vperm.xlu0 %974, %v941
        %v976 = vpop.permute.xlu0 %975
        %979 = vset.pattern.permute.xlu0 0
        %980 = vperm.xlu0 %979, %v942
        %v981 = vpop.permute.xlu0 %980
        %vm983 = vcmask 588800
        %v985 = vsel %vm983, %v909, 0
        %v988 = vsel %vm983, %v910, 0
        %v991 = vsel %vm983, %v911, 0
        %v994 = vsel %vm983, %v912, 0
        %v997 = vsel %vm983, %v913, 0
        %v1000 = vsel %vm983, %v914, 0
        %v1003 = vsel %vm983, %v915, 0
        %v1006 = vsel %vm983, %v916, 0
        %1008 = vmatprep.subr.mxu0 %v918
        %1009 = vmatpush1.msra.mxu0 %v917
        %1010 = vmatprep.subr.mxu0 %v920
        %1011 = vmatpush1.msra.mxu0 %v919
        %1012 = vmatprep.subr.mxu0 %v922
        %1013 = vmatpush1.msra.mxu0 %v921
        %1014 = vmatprep.subr.mxu0 %v924
        %1015 = vmatpush1.msra.mxu0 %v923
        %1016 = vmatprep.subr.mxu0 %v926
        %1017 = vmatpush1.msra.mxu0 %v925
        %1018 = vmatprep.subr.mxu0 %v928
        %1019 = vmatpush1.msra.mxu0 %v927
        %1020 = vmatprep.subr.mxu0 %v930
        %1021 = vmatpush1.msra.mxu0 %v929
        %1022 = vmatprep.subr.mxu0 %v932
        %1023 = vmatpush1.msra.mxu0 %v931
        %1024 = vmatprep.subr.mxu0 %v934
        %1025 = vmatpush1.msra.mxu0 %v933
        %1026 = vmatprep.subr.mxu0 0.0
        %1027 = vmatpush1.msra.mxu0 0.0
        %1028 = vmatprep.subr.mxu0 0.0
        %1029 = vmatpush1.msra.mxu0 0.0
        %1030 = vmatprep.subr.mxu0 0.0
        %1031 = vmatpush1.msra.mxu0 0.0
        %1032 = vmatprep.subr.mxu0 0.0
        %1033 = vmatpush1.msra.mxu0 0.0
        %1034 = vmatprep.subr.mxu0 0.0
        %1035 = vmatpush1.msra.mxu0 0.0
        %1036 = vmatprep.subr.mxu0 0.0
        %1037 = vmatpush1.msra.mxu0 0.0
        %1038 = vmatprep.subr.mxu0 0.0
        %1039 = vmatpush1.msra.mxu0 0.0
        %1040 = vmatprep.subr.mxu0 0.0
        %1041 = vmatpush1.msra.mxu0 0.0
        %1042 = vmatprep.subr.mxu0 0.0
        %1043 = vmatpush1.msra.mxu0 0.0
        %1044 = vmatprep.subr.mxu0 0.0
        %1045 = vmatpush1.msra.mxu0 0.0
        %1046 = vmatprep.subr.mxu0 0.0
        %1047 = vmatpush1.msra.mxu0 0.0
        %1048 = vmatprep.subr.mxu0 0.0
        %1049 = vmatpush1.msra.mxu0 0.0
        %1050 = vmatprep.subr.mxu0 0.0
        %1051 = vmatpush1.msra.mxu0 0.0
        %1052 = vmatprep.subr.mxu0 0.0
        %1053 = vmatpush1.msra.mxu0 0.0
        %1054 = vmatprep.subr.mxu0 0.0
        %1055 = vmatpush1.msra.mxu0 0.0
        %1056 = vmatprep.subr.mxu0 0.0
        %1057 = vmatpush1.msra.mxu0 0.0
        %1058 = vmatprep.subr.mxu0 0.0
        %1059 = vmatpush1.msra.mxu0 0.0
        %1060 = vmatprep.subr.mxu0 0.0
        %1061 = vmatpush1.msra.mxu0 0.0
        %1062 = vmatprep.subr.mxu0 0.0
        %1063 = vmatpush1.msra.mxu0 0.0
        %1064 = vmatprep.subr.mxu0 0.0
        %1065 = vmatpush1.msra.mxu0 0.0
        %1066 = vmatprep.subr.mxu0 0.0
        %1067 = vmatpush1.msra.mxu0 0.0
        %1068 = vmatprep.subr.mxu0 0.0
        %1069 = vmatpush1.msra.mxu0 0.0
        %1070 = vmatprep.subr.mxu0 0.0
        %1071 = vmatpush1.msra.mxu0 0.0
        %1072 = vmatprep.mubr.f32.mxu0 0.0
        %1073 = vmatmul.mubr.f32.gmra.mrb[0].mxu0 %v985
        %v1074 = vpop.f32.mrb[0].mxu0
        %v1075 = vadd.f32 %v946, %v1074
        %v1076 = vpop.f32.mrb[0].mxu0
        %v1077 = vadd.f32 %v946, %v1076
        %1078 = vmatprep.mubr.f32.mxu0 0.0
        %1079 = vmatmul.mubr.f32.gmra.mrb[0].mxu0 %v988
        %v1080 = vpop.f32.mrb[0].mxu0
        %v1081 = vadd.f32 %v951, %v1080
        %v1082 = vpop.f32.mrb[0].mxu0
        %v1083 = vadd.f32 %v951, %v1082
        %1084 = vmatprep.mubr.f32.mxu0 0.0
        %1085 = vmatmul.mubr.f32.gmra.mrb[0].mxu0 %v991
        %v1086 = vpop.f32.mrb[0].mxu0
        %v1087 = vadd.f32 %v956, %v1086
        %v1088 = vpop.f32.mrb[0].mxu0
        %v1089 = vadd.f32 %v956, %v1088
        %1090 = vmatprep.mubr.f32.mxu0 0.0
        %1091 = vmatmul.mubr.f32.gmra.mrb[0].mxu0 %v994
        %v1092 = vpop.f32.mrb[0].mxu0
        %v1093 = vadd.f32 %v961, %v1092
        %v1094 = vpop.f32.mrb[0].mxu0
        %v1095 = vadd.f32 %v961, %v1094
        %1096 = vmatprep.mubr.f32.mxu0 0.0
        %1097 = vmatmul.mubr.f32.gmra.mrb[0].mxu0 %v997
        %v1098 = vpop.f32.mrb[0].mxu0
        %v1099 = vadd.f32 %v966, %v1098
        %v1100 = vpop.f32.mrb[0].mxu0
        %v1101 = vadd.f32 %v966, %v1100
        %1102 = vmatprep.mubr.f32.mxu0 0.0
        %1103 = vmatmul.mubr.f32.gmra.mrb[0].mxu0 %v1000
        %v1104 = vpop.f32.mrb[0].mxu0
        %v1105 = vadd.f32 %v971, %v1104
        %v1106 = vpop.f32.mrb[0].mxu0
        %v1107 = vadd.f32 %v971, %v1106
        %1108 = vmatprep.mubr.f32.mxu0 0.0
        %1109 = vmatmul.mubr.f32.gmra.mrb[0].mxu0 %v1003
        %v1110 = vpop.f32.mrb[0].mxu0
        %v1111 = vadd.f32 %v976, %v1110
        %v1112 = vpop.f32.mrb[0].mxu0
        %v1113 = vadd.f32 %v976, %v1112
        %1114 = vmatprep.mubr.f32.mxu0 0.0
        %1115 = vmatmul.mubr.f32.gmra.mrb[0].mxu0 %v1006
        %v1116 = vpop.f32.mrb[0].mxu0
        %v1117 = vadd.f32 %v981, %v1116
        %v1118 = vpop.f32.mrb[0].mxu0
        %v1119 = vadd.f32 %v981, %v1118
        %1120 = vdwg.mxu0
        %v1121 = vmax.f32 %v1075, 0.0
        %v1122 = vmax.f32 %v1077, 0.0
        %v1123 = vmax.f32 %v1081, 0.0
        %v1124 = vmax.f32 %v1083, 0.0
        %v1125 = vmax.f32 %v1087, 0.0
        %v1126 = vmax.f32 %v1089, 0.0
        %v1127 = vmax.f32 %v1093, 0.0
        %v1128 = vmax.f32 %v1095, 0.0
        %v1129 = vmax.f32 %v1099, 0.0
        %v1130 = vmax.f32 %v1101, 0.0
        %v1131 = vmax.f32 %v1105, 0.0
        %v1132 = vmax.f32 %v1107, 0.0
        %v1133 = vmax.f32 %v1111, 0.0
        %v1134 = vmax.f32 %v1113, 0.0
        %v1135 = vmax.f32 %v1117, 0.0
        %v1136 = vmax.f32 %v1119, 0.0
        %v1137 = vlaneseq
        %v1138 = vand.u32 %v1137, 127
        %v1139 = vadd.s32 %v1138, 128
        %s1140 = ssub.s32 1, %s285
        %s1141 = smul.u32 %s1140, 18
        %s1142 = ssub.s32 17, %s285
        %s1143 = smul.u32 %s1142, 18
        %v1144 = vstv %s1141
        %vm1145 = vcmp.ge.s32.totalorder %v1138, %v1144
        %vm1146 = vcmp.ge.s32.totalorder %v1139, %v1144
        %v1147 = vstv %s1143
        %vm1148 = vcmp.lt.s32.totalorder %v1138, %v1147
        %vm1149 = vcmp.lt.s32.totalorder %v1139, %v1147
        %vm1150 = vmand %vm1145, %vm1148
        %vm1151 = vmand %vm1146, %vm1149
        %v1152 = vsel %vm1150, 1, 0
        %v1153 = vsel %vm1151, 1, 0
        %vm1154 = vcmp.eq.s32.totalorder %v1152, 1
        %vm1155 = vcmp.eq.s32.totalorder %v1153, 1
        %v1156 = vsel %vm1154, %v1121, 0.0
        %v1157 = vsel %vm1155, %v1122, 0.0
        %v1158 = vsel %vm1154, %v1123, 0.0
        %v1159 = vsel %vm1155, %v1124, 0.0
        %v1160 = vsel %vm1154, %v1125, 0.0
        %v1161 = vsel %vm1155, %v1126, 0.0
        %v1162 = vsel %vm1154, %v1127, 0.0
        %v1163 = vsel %vm1155, %v1128, 0.0
        %v1164 = vsel %vm1154, %v1129, 0.0
        %v1165 = vsel %vm1155, %v1130, 0.0
        %v1166 = vsel %vm1154, %v1131, 0.0
        %v1167 = vsel %vm1155, %v1132, 0.0
        %v1168 = vsel %vm1154, %v1133, 0.0
        %v1169 = vsel %vm1155, %v1134, 0.0
        %v1170 = vsel %vm1154, %v1135, 0.0
        %v1171 = vsel %vm1155, %v1136, 0.0
        %v1172 = vld [vmem:[%s5] sm:$0x3]
        %v1174 = vlaneseq
        %v1175 = vshrl.u32 %v1174, 7
        %v1176 = vsub.s32 0, %v1175
        %v1177 = vrot.slane %v1172, %v1176
        %v1178 = vlaneseq
        %v1179 = vshrl.u32 %v1178, 7
        %v1180 = vsub.s32 1, %v1179
        %v1181 = vrot.slane %v1172, %v1180
        %v1184 = vmul.f32 %v1156, %v1177
        %v1185 = vmul.f32 %v1157, %v1181
        %v1186 = vmul.f32 %v1158, %v1177
        %v1187 = vmul.f32 %v1159, %v1181
        %v1188 = vmul.f32 %v1160, %v1177
        %v1189 = vmul.f32 %v1161, %v1181
        %v1190 = vmul.f32 %v1162, %v1177
        %v1191 = vmul.f32 %v1163, %v1181
        %v1192 = vmul.f32 %v1164, %v1177
        %v1193 = vmul.f32 %v1165, %v1181
        %v1194 = vmul.f32 %v1166, %v1177
        %v1195 = vmul.f32 %v1167, %v1181
        %v1196 = vmul.f32 %v1168, %v1177
        %v1197 = vmul.f32 %v1169, %v1181
        %v1198 = vmul.f32 %v1170, %v1177
        %v1199 = vmul.f32 %v1171, %v1181
        %1200 = vst [vmem:[#allocation4] sm:$0xff] 0
        %1201 = vst [vmem:[#allocation4 + $0x18] sm:$0xff] 0
        %1202 = vst [vmem:[#allocation4 + $0x30] sm:$0xff] 0
        %1203 = vst [vmem:[#allocation4 + $0x48] sm:$0xff] 0
        %vm1204 = vcmask 490912
        %1205 = vst.msk [vmem:[#allocation4 + $0x10] sm:$0xff] %vm1204, 0
        %1206 = vst.msk [vmem:[#allocation4 + $0x28] sm:$0xff] %vm1204, 0
        %1207 = vst.msk [vmem:[#allocation4 + $0x40] sm:$0xff] %vm1204, 0
        %1208 = vst.msk [vmem:[#allocation4 + $0x58] sm:$0xff] %vm1204, 0
        %v1209 = vpack.c.bf16 %v1186, %v1184
        %v1210 = vpack.c.bf16 %v1187, %v1185
        %v1211 = vpack.c.bf16 %v1190, %v1188
        %v1212 = vpack.c.bf16 %v1191, %v1189
        %v1213 = vpack.c.bf16 %v1194, %v1192
        %v1214 = vpack.c.bf16 %v1195, %v1193
        %v1215 = vpack.c.bf16 %v1198, %v1196
        %v1216 = vpack.c.bf16 %v1199, %v1197
        %1217 = vst [vmem:[#allocation4 + $0x8] sm:$0xff] %v1209
        %1218 = vst.msk [vmem:[#allocation4 + $0x10] sm:$0xff] %vm805, %v1210
        %1219 = vst [vmem:[#allocation4 + $0x20] sm:$0xff] %v1211
        %1220 = vst.msk [vmem:[#allocation4 + $0x28] sm:$0xff] %vm805, %v1212
        %1221 = vst [vmem:[#allocation4 + $0x38] sm:$0xff] %v1213
        %1222 = vst.msk [vmem:[#allocation4 + $0x40] sm:$0xff] %vm805, %v1214
        %1223 = vst [vmem:[#allocation4 + $0x50] sm:$0xff] %v1215
        %1224 = vst.msk [vmem:[#allocation4 + $0x58] sm:$0xff] %vm805, %v1216
        %v1225 = vld [vmem:[%s4] sm:$0x3]
        %1227 = vset.pattern.permute.xlu0 0
        %1228 = vperm.xlu0 %1227, %v1225
        %v1229 = vpop.permute.xlu0 %1228
        %v1231 = vadd.f32 %v1229, 0.0
        %v1232 = vld [vmem:[%s3] sm:$0x7]
        %v1233 = vld [vmem:[#allocation4] sm:$0xff]
        %v1234 = vld [vmem:[#allocation4 + $0x8] sm:$0xff]
        %v1235 = vld [vmem:[#allocation4 + $0x10] sm:$0xff]
        %v1236 = vld [vmem:[#allocation4 + $0x18] sm:$0xff]
        %v1237 = vld [vmem:[#allocation4 + $0x20] sm:$0xff]
        %v1238 = vld [vmem:[#allocation4 + $0x28] sm:$0xff]
        %v1239 = vld [vmem:[#allocation4 + $0x30] sm:$0xff]
        %v1240 = vld [vmem:[#allocation4 + $0x38] sm:$0xff]
        %v1241 = vld [vmem:[#allocation4 + $0x40] sm:$0xff]
        %v1242 = vld [vmem:[#allocation4 + $0x48] sm:$0xff]
        %v1243 = vld [vmem:[#allocation4 + $0x50] sm:$0xff]
        %v1244 = vld [vmem:[#allocation4 + $0x58] sm:$0xff]
        %1257 = vrot.lane.b32.xlu0 %v1233, 1
        %v1258 = vpop.permute.xlu0 %1257
        %1259 = vrot.lane.b32.xlu0 %v1234, 1
        %v1260 = vpop.permute.xlu0 %1259
        %1261 = vrot.lane.b32.xlu0 %v1235, 1
        %v1262 = vpop.permute.xlu0 %1261
        %1263 = vrot.lane.b32.xlu0 %v1236, 1
        %v1264 = vpop.permute.xlu0 %1263
        %1265 = vrot.lane.b32.xlu0 %v1237, 1
        %v1266 = vpop.permute.xlu0 %1265
        %1267 = vrot.lane.b32.xlu0 %v1238, 1
        %v1268 = vpop.permute.xlu0 %1267
        %1269 = vrot.lane.b32.xlu0 %v1239, 1
        %v1270 = vpop.permute.xlu0 %1269
        %1271 = vrot.lane.b32.xlu0 %v1240, 1
        %v1272 = vpop.permute.xlu0 %1271
        %1273 = vrot.lane.b32.xlu0 %v1241, 1
        %v1274 = vpop.permute.xlu0 %1273
        %1275 = vrot.lane.b32.xlu0 %v1242, 1
        %v1276 = vpop.permute.xlu0 %1275
        %1277 = vrot.lane.b32.xlu0 %v1243, 1
        %v1278 = vpop.permute.xlu0 %1277
        %1279 = vrot.lane.b32.xlu0 %v1244, 1
        %v1280 = vpop.permute.xlu0 %1279
        %vm1281 = vcmask 7168
        %v1282 = vsel %vm1281, %v1258, %v1260
        %v1283 = vsel %vm1281, %v1260, %v1262
        %v1284 = vsel %vm1281, %v1264, %v1266
        %v1285 = vsel %vm1281, %v1266, %v1268
        %v1286 = vsel %vm1281, %v1270, %v1272
        %v1287 = vsel %vm1281, %v1272, %v1274
        %v1288 = vsel %vm1281, %v1276, %v1278
        %v1289 = vsel %vm1281, %v1278, %v1280
        %vm1298 = vcmask 523264
        %v1300 = vsel %vm1298, %v1232, 0
        %1302 = vmatprep.subr.bf16.mxu0 %v1283
        %1303 = vmatpush1.bf16.msra.mxu0 %v1282
        %1304 = vmatprep.subr.bf16.mxu0 %v1285
        %1305 = vmatpush1.bf16.msra.mxu0 %v1284
        %1306 = vmatprep.subr.bf16.mxu0 %v1287
        %1307 = vmatpush1.bf16.msra.mxu0 %v1286
        %1308 = vmatprep.subr.bf16.mxu0 %v1289
        %1309 = vmatpush1.bf16.msra.mxu0 %v1288
        %1310 = vmatprep.subr.bf16.mxu0 0
        %1311 = vmatpush1.bf16.msra.mxu0 0
        %1312 = vmatprep.subr.bf16.mxu0 0
        %1313 = vmatpush1.bf16.msra.mxu0 0
        %1314 = vmatprep.subr.bf16.mxu0 0
        %1315 = vmatpush1.bf16.msra.mxu0 0
        %1316 = vmatprep.subr.bf16.mxu0 0
        %1317 = vmatpush1.bf16.msra.mxu0 0
        %1318 = vmatprep.subr.bf16.mxu0 0
        %1319 = vmatpush1.bf16.msra.mxu0 0
        %1320 = vmatprep.subr.bf16.mxu0 0
        %1321 = vmatpush1.bf16.msra.mxu0 0
        %1322 = vmatprep.subr.bf16.mxu0 0
        %1323 = vmatpush1.bf16.msra.mxu0 0
        %1324 = vmatprep.subr.bf16.mxu0 0
        %1325 = vmatpush1.bf16.msra.mxu0 0
        %1326 = vmatprep.subr.bf16.mxu0 0
        %1327 = vmatpush1.bf16.msra.mxu0 0
        %1328 = vmatprep.subr.bf16.mxu0 0
        %1329 = vmatpush1.bf16.msra.mxu0 0
        %1330 = vmatprep.subr.bf16.mxu0 0
        %1331 = vmatpush1.bf16.msra.mxu0 0
        %1332 = vmatprep.subr.bf16.mxu0 0
        %1333 = vmatpush1.bf16.msra.mxu0 0
        %1334 = vmatprep.mubr.bf16.mxu0 0
        %1335 = vmatmul.mubr.bf16.gmra.mrb[0].mxu0 %v1300
        %v1336 = vpop.f32.mrb[0].mxu0
        %v1337 = vadd.f32 0.0, %v1336
        %v1338 = vpop.f32.mrb[0].mxu0
        %v1339 = vadd.f32 0.0, %v1338
        %v1340 = vpop.f32.mrb[0].mxu0
        %v1341 = vpop.f32.mrb[0].mxu0
        %1342 = vdwg.mxu0
        %v1343 = vadd.f32 %v1231, %v1337
        %v1344 = vadd.f32 %v1231, %v1339
        %v1347 = vrot.slane %v1337, 2
        %v1348 = vrot.slane %v1339, 2
        %1349 = vrot.lane.b32.xlu0 %v1347, 127
        %v1350 = vpop.permute.xlu0 %1349
        %1351 = vrot.lane.b32.xlu0 %v1348, 127
        %v1352 = vpop.permute.xlu0 %1351
        %v1353 = vsel %vm819, %v1350, %v1352
        %v1356 = vadd.f32 %v1343, %v1353
        %v1357 = vadd.f32 %v1344, %v1352
        %v1358 = vrot.slane %v1337, 4
        %v1359 = vrot.slane %v1339, 4
        %1360 = vrot.lane.b32.xlu0 %v1358, 126
        %v1361 = vpop.permute.xlu0 %1360
        %1362 = vrot.lane.b32.xlu0 %v1359, 126
        %v1363 = vpop.permute.xlu0 %1362
        %vm1364 = vcmask 1031168
        %v1365 = vsel %vm1364, %v1361, %v1363
        %v1368 = vadd.f32 %v1356, %v1365
        %v1369 = vadd.f32 %v1357, %v1363
        %s1370 = scalar_lea.vmem %s3, 4
        %v1371 = vld [vmem:[%s1370] sm:$0x7]
        %1372 = vrot.lane.b32.xlu0 %v1234, 111
        %v1373 = vpop.permute.xlu0 %1372
        %1374 = vrot.lane.b32.xlu0 %v1235, 111
        %v1375 = vpop.permute.xlu0 %1374
        %1376 = vrot.lane.b32.xlu0 %v1237, 111
        %v1377 = vpop.permute.xlu0 %1376
        %1378 = vrot.lane.b32.xlu0 %v1238, 111
        %v1379 = vpop.permute.xlu0 %1378
        %1380 = vrot.lane.b32.xlu0 %v1240, 111
        %v1381 = vpop.permute.xlu0 %1380
        %1382 = vrot.lane.b32.xlu0 %v1241, 111
        %v1383 = vpop.permute.xlu0 %1382
        %1384 = vrot.lane.b32.xlu0 %v1243, 111
        %v1385 = vpop.permute.xlu0 %1384
        %1386 = vrot.lane.b32.xlu0 %v1244, 111
        %v1387 = vpop.permute.xlu0 %1386
        %vm1388 = vcmask 908288
        %v1389 = vsel %vm1388, %v1373, %v1375
        %v1390 = vsel %vm1388, %v1377, %v1379
        %v1391 = vsel %vm1388, %v1381, %v1383
        %v1392 = vsel %vm1388, %v1385, %v1387
        %v1402 = vsel %vm1298, %v1371, 0
        %1404 = vmatprep.subr.bf16.mxu0 %v1375
        %1405 = vmatpush1.bf16.msra.mxu0 %v1389
        %1406 = vmatprep.subr.bf16.mxu0 %v1379
        %1407 = vmatpush1.bf16.msra.mxu0 %v1390
        %1408 = vmatprep.subr.bf16.mxu0 %v1383
        %1409 = vmatpush1.bf16.msra.mxu0 %v1391
        %1410 = vmatprep.subr.bf16.mxu0 %v1387
        %1411 = vmatpush1.bf16.msra.mxu0 %v1392
        %1412 = vmatprep.subr.bf16.mxu0 0
        %1413 = vmatpush1.bf16.msra.mxu0 0
        %1414 = vmatprep.subr.bf16.mxu0 0
        %1415 = vmatpush1.bf16.msra.mxu0 0
        %1416 = vmatprep.subr.bf16.mxu0 0
        %1417 = vmatpush1.bf16.msra.mxu0 0
        %1418 = vmatprep.subr.bf16.mxu0 0
        %1419 = vmatpush1.bf16.msra.mxu0 0
        %1420 = vmatprep.subr.bf16.mxu0 0
        %1421 = vmatpush1.bf16.msra.mxu0 0
        %1422 = vmatprep.subr.bf16.mxu0 0
        %1423 = vmatpush1.bf16.msra.mxu0 0
        %1424 = vmatprep.subr.bf16.mxu0 0
        %1425 = vmatpush1.bf16.msra.mxu0 0
        %1426 = vmatprep.subr.bf16.mxu0 0
        %1427 = vmatpush1.bf16.msra.mxu0 0
        %1428 = vmatprep.subr.bf16.mxu0 0
        %1429 = vmatpush1.bf16.msra.mxu0 0
        %1430 = vmatprep.subr.bf16.mxu0 0
        %1431 = vmatpush1.bf16.msra.mxu0 0
        %1432 = vmatprep.subr.bf16.mxu0 0
        %1433 = vmatpush1.bf16.msra.mxu0 0
        %1434 = vmatprep.subr.bf16.mxu0 0
        %1435 = vmatpush1.bf16.msra.mxu0 0
        %1436 = vmatprep.mubr.bf16.mxu0 0
        %1437 = vmatmul.mubr.bf16.gmra.mrb[0].mxu0 %v1402
        %v1438 = vpop.f32.mrb[0].mxu0
        %v1439 = vadd.f32 0.0, %v1438
        %v1440 = vpop.f32.mrb[0].mxu0
        %v1441 = vadd.f32 0.0, %v1440
        %v1442 = vpop.f32.mrb[0].mxu0
        %v1443 = vpop.f32.mrb[0].mxu0
        %1444 = vdwg.mxu0
        %v1445 = vadd.f32 %v1368, %v1439
        %v1446 = vadd.f32 %v1369, %v1441
        %v1449 = vrot.slane %v1439, 2
        %v1450 = vrot.slane %v1441, 2
        %1451 = vrot.lane.b32.xlu0 %v1449, 127
        %v1452 = vpop.permute.xlu0 %1451
        %1453 = vrot.lane.b32.xlu0 %v1450, 127
        %v1454 = vpop.permute.xlu0 %1453
        %v1455 = vsel %vm819, %v1452, %v1454
        %v1458 = vadd.f32 %v1445, %v1455
        %v1459 = vadd.f32 %v1446, %v1454
        %v1460 = vrot.slane %v1439, 4
        %v1461 = vrot.slane %v1441, 4
        %1462 = vrot.lane.b32.xlu0 %v1460, 126
        %v1463 = vpop.permute.xlu0 %1462
        %1464 = vrot.lane.b32.xlu0 %v1461, 126
        %v1465 = vpop.permute.xlu0 %1464
        %v1466 = vsel %vm1364, %v1463, %v1465
        %v1469 = vadd.f32 %v1458, %v1466
        %v1470 = vadd.f32 %v1459, %v1465
        %s1471 = scalar_lea.vmem %s3, 8
        %v1472 = vld [vmem:[%s1471] sm:$0x7]
        %1473 = vrot.lane.b32.xlu0 %v1234, 93
        %v1474 = vpop.permute.xlu0 %1473
        %1475 = vrot.lane.b32.xlu0 %v1235, 93
        %v1476 = vpop.permute.xlu0 %1475
        %1477 = vrot.lane.b32.xlu0 %v1237, 93
        %v1478 = vpop.permute.xlu0 %1477
        %1479 = vrot.lane.b32.xlu0 %v1238, 93
        %v1480 = vpop.permute.xlu0 %1479
        %1481 = vrot.lane.b32.xlu0 %v1240, 93
        %v1482 = vpop.permute.xlu0 %1481
        %1483 = vrot.lane.b32.xlu0 %v1241, 93
        %v1484 = vpop.permute.xlu0 %1483
        %1485 = vrot.lane.b32.xlu0 %v1243, 93
        %v1486 = vpop.permute.xlu0 %1485
        %1487 = vrot.lane.b32.xlu0 %v1244, 93
        %v1488 = vpop.permute.xlu0 %1487
        %vm1489 = vcmask 760832
        %v1490 = vsel %vm1489, %v1474, %v1476
        %v1491 = vsel %vm1489, %v1478, %v1480
        %v1492 = vsel %vm1489, %v1482, %v1484
        %v1493 = vsel %vm1489, %v1486, %v1488
        %v1503 = vsel %vm1298, %v1472, 0
        %1505 = vmatprep.subr.bf16.mxu0 %v1476
        %1506 = vmatpush1.bf16.msra.mxu0 %v1490
        %1507 = vmatprep.subr.bf16.mxu0 %v1480
        %1508 = vmatpush1.bf16.msra.mxu0 %v1491
        %1509 = vmatprep.subr.bf16.mxu0 %v1484
        %1510 = vmatpush1.bf16.msra.mxu0 %v1492
        %1511 = vmatprep.subr.bf16.mxu0 %v1488
        %1512 = vmatpush1.bf16.msra.mxu0 %v1493
        %1513 = vmatprep.subr.bf16.mxu0 0
        %1514 = vmatpush1.bf16.msra.mxu0 0
        %1515 = vmatprep.subr.bf16.mxu0 0
        %1516 = vmatpush1.bf16.msra.mxu0 0
        %1517 = vmatprep.subr.bf16.mxu0 0
        %1518 = vmatpush1.bf16.msra.mxu0 0
        %1519 = vmatprep.subr.bf16.mxu0 0
        %1520 = vmatpush1.bf16.msra.mxu0 0
        %1521 = vmatprep.subr.bf16.mxu0 0
        %1522 = vmatpush1.bf16.msra.mxu0 0
        %1523 = vmatprep.subr.bf16.mxu0 0
        %1524 = vmatpush1.bf16.msra.mxu0 0
        %1525 = vmatprep.subr.bf16.mxu0 0
        %1526 = vmatpush1.bf16.msra.mxu0 0
        %1527 = vmatprep.subr.bf16.mxu0 0
        %1528 = vmatpush1.bf16.msra.mxu0 0
        %1529 = vmatprep.subr.bf16.mxu0 0
        %1530 = vmatpush1.bf16.msra.mxu0 0
        %1531 = vmatprep.subr.bf16.mxu0 0
        %1532 = vmatpush1.bf16.msra.mxu0 0
        %1533 = vmatprep.subr.bf16.mxu0 0
        %1534 = vmatpush1.bf16.msra.mxu0 0
        %1535 = vmatprep.subr.bf16.mxu0 0
        %1536 = vmatpush1.bf16.msra.mxu0 0
        %1537 = vmatprep.mubr.bf16.mxu0 0
        %1538 = vmatmul.mubr.bf16.gmra.mrb[0].mxu0 %v1503
        %v1539 = vpop.f32.mrb[0].mxu0
        %v1540 = vadd.f32 0.0, %v1539
        %v1541 = vpop.f32.mrb[0].mxu0
        %v1542 = vadd.f32 0.0, %v1541
        %v1543 = vpop.f32.mrb[0].mxu0
        %v1544 = vpop.f32.mrb[0].mxu0
        %1545 = vdwg.mxu0
        %v1546 = vadd.f32 %v1469, %v1540
        %v1547 = vadd.f32 %v1470, %v1542
        %v1550 = vrot.slane %v1540, 2
        %v1551 = vrot.slane %v1542, 2
        %1552 = vrot.lane.b32.xlu0 %v1550, 127
        %v1553 = vpop.permute.xlu0 %1552
        %1554 = vrot.lane.b32.xlu0 %v1551, 127
        %v1555 = vpop.permute.xlu0 %1554
        %v1556 = vsel %vm819, %v1553, %v1555
        %v1559 = vadd.f32 %v1546, %v1556
        %v1560 = vadd.f32 %v1547, %v1555
        %v1561 = vrot.slane %v1540, 4
        %v1562 = vrot.slane %v1542, 4
        %1563 = vrot.lane.b32.xlu0 %v1561, 126
        %v1564 = vpop.permute.xlu0 %1563
        %1565 = vrot.lane.b32.xlu0 %v1562, 126
        %v1566 = vpop.permute.xlu0 %1565
        %v1567 = vsel %vm1364, %v1564, %v1566
        %v1570 = vadd.f32 %v1559, %v1567
        %v1571 = vadd.f32 %v1560, %v1566
        %1573 = vrot.lane.b32.xlu0 %v1570, 127
        %v1574 = vpop.permute.xlu0 %1573
        %vm1576 = vcmask 123904
        %1577 = vst.msk [vmem:[%s283] sm:$0x3] %vm1576, %v1574
        %1578 = vrot.lane.b32.xlu0 %v1570, 125
        %v1579 = vpop.permute.xlu0 %1578
        %vm1581 = vcmask 255104
        %1582 = vst.msk [vmem:[%s283] sm:$0x3] %vm1581, %v1579
        %1583 = vrot.lane.b32.xlu0 %v1570, 123
        %v1584 = vpop.permute.xlu0 %1583
        %vm1586 = vcmask 386304
        %1587 = vst.msk [vmem:[%s283] sm:$0x3] %vm1586, %v1584
        %1588 = vrot.lane.b32.xlu0 %v1570, 121
        %v1589 = vpop.permute.xlu0 %1588
        %vm1591 = vcmask 517504
        %1592 = vst.msk [vmem:[%s283] sm:$0x3] %vm1591, %v1589
        %1593 = vrot.lane.b32.xlu0 %v1570, 119
        %v1594 = vpop.permute.xlu0 %1593
        %vm1596 = vcmask 648704
        %1597 = vst.msk [vmem:[%s283] sm:$0x3] %vm1596, %v1594
        %1598 = vrot.lane.b32.xlu0 %v1570, 117
        %v1599 = vpop.permute.xlu0 %1598
        %vm1601 = vcmask 779904
        %1602 = vst.msk [vmem:[%s283] sm:$0x3] %vm1601, %v1599
        %1603 = vrot.lane.b32.xlu0 %v1570, 115
        %v1604 = vpop.permute.xlu0 %1603
        %vm1606 = vcmask 911104
        %1607 = vst.msk [vmem:[%s283] sm:$0x3] %vm1606, %v1604
        %1609 = vrot.lane.b32.xlu0 %v1570, 113
        %v1610 = vpop.permute.xlu0 %1609
        %1611 = vrot.lane.b32.xlu0 %v1571, 113
        %v1612 = vpop.permute.xlu0 %1611
        %vm1613 = vcmask 924672
        %v1614 = vsel %vm1613, %v1610, %v1612
        %vm1616 = vcmask 1042304
        %1617 = vst.msk [vmem:[%s283] sm:$0x3] %vm1616, %v1614
        %s1618 = sand.u32 %s176, 1
        %s1619 = scalar_lea.sflag [#allocation7], %s1618
        %s1620 = sand.u32 %s176, 1
        %s1621 = smul.addr %s1620, 2
        %s1622 = scalar_lea.vmem [#allocation8], %s1621
        // Predicated region
        $region49: #{tpu_custom_call.1} parent=43 // pred_check
          %p1623 = pneg %p186
        $region50: #{tpu_custom_call.1} parent=43 // pred_check_branch
          %1625 = sbr.rel (%p1623) target = $region52
        $region51: #{tpu_custom_call.1} parent=43 // pred_region
          %s1627 = ssub.s32 32, 32
          %1628 = vsyncadd %s1619, %s1627
          %s1629 = smul.addr %s27, 2
          %s1630 = sadd.s32 %s28, %s1629
          %s1631 = smul.addr %s1630, 32
          %s1632 = scalar_lea.hbm %s6, %s1631
          %s1634 = sshll.u32 %s1622, 4
          %s1635 = int_to_ptr.vmem [resolvable:$true] %s1634
          %1637 = dma.vmem_to_hbm [thread:$0]  %s1635, 32, %s1632, %s1619
        $region52: #{tpu_custom_call.1} parent=43 // pred_fallthru
          _
      $region44: #{tpu_custom_call.1} parent=5 // pred_fallthru
        _
      %p1638 = scmp.le.s32.totalorder 2, %s18
      // Predicated region
      $region53: #{tpu_custom_call.1} parent=5 // pred_check
        %p1639 = pneg %p1638
      $region54: #{tpu_custom_call.1} parent=5 // pred_check_branch
        %1641 = sbr.rel (%p1639) target = $region56
      $region55: #{tpu_custom_call.1} parent=5 // pred_region
        %s1642 = ssub.s32 %s18, 2
        // Predicated region
        $region57: #{tpu_custom_call.1} parent=55 // pred_check
          %p1643 = pneg %p192
        $region58: #{tpu_custom_call.1} parent=55 // pred_check_branch
          %1645 = sbr.rel (%p1643) target = $region60
        $region59: #{tpu_custom_call.1} parent=55 // pred_region
          %s1646 = sand.u32 %s177, 1
          %s1647 = scalar_lea.sflag [#allocation7], %s1646
          %s1648 = sand.u32 %s177, 1
          %s1649 = smul.addr %s1648, 2
          %s1650 = scalar_lea.vmem [#allocation8], %s1649
          %1651 = dma.done %s1647, 32
        $region60: #{tpu_custom_call.1} parent=55 // pred_fallthru
          _
      $region56: #{tpu_custom_call.1} parent=5 // pred_fallthru
        _
    $region6: #{tpu_custom_call.1} parent=1 // loop_footer
      %s22 = sadd.s32 1, %s18
    $region7: #{tpu_custom_call.1} parent=1 // loop_footer_branch
      %17 = sbr.rel target = $region3
    $region8: #{tpu_custom_call.1} parent=1 // loop_exit
      _
    %1652 = vsyncpa [#allocation6], 1
    %s1653 = scalar_lea.sflag [#allocation6], 1
    %1654 = vsyncpa %s1653, 1
    %1655 = vsyncpa [#allocation7], 1
    %s1656 = scalar_lea.sflag [#allocation7], 1
    %1657 = vsyncpa %s1656, 1

</llo_original>
